<compile_context>
chip_gen: v6e
topology: v6e:2x2x1
jax: 0.10.0
libtpu: 0.0.40
codegen_flags: <defaults>
</compile_context>

<pallas_src>
import functools

import jax
import jax.numpy as jnp
from jax import lax
from jax.experimental import pallas as pl
from jax.experimental.pallas import tpu as pltpu


def _gates(z, c):
    """PyTorch LSTM gate math (i, f, g, o order). z:(B,4H) f32, c:(B,H) f32.

    sigmoid/tanh are evaluated once over the full (B,4H) value and sliced
    afterwards — fewer EUP ops on the per-step dependent chain, numerically
    identical to per-gate evaluation (elementwise)."""
    H = c.shape[-1]
    sg = jax.nn.sigmoid(z)
    th = jnp.tanh(z)
    i = sg[:, 0 * H:1 * H]
    f = sg[:, 1 * H:2 * H]
    g = th[:, 2 * H:3 * H]
    o = sg[:, 3 * H:4 * H]
    c_new = f * c + i * g
    h_new = o * jnp.tanh(c_new)
    return h_new, c_new


def _argmax_onehot(logits, vocab):
    """First-occurrence argmax (PyTorch semantics) as a bf16 one-hot matrix
    (0/1 are exact in bf16), so the embedding/projection lookup becomes a
    single-pass bf16 MXU matmul (no gather on TPU)."""
    col = lax.broadcasted_iota(jnp.int32, logits.shape, 1)
    mx = jnp.max(logits, axis=-1, keepdims=True)
    cand = jnp.where(logits >= mx, col, vocab)
    idx = jnp.min(cand, axis=-1, keepdims=True)
    return (col == idx).astype(jnp.bfloat16)


def _ar_lstm_kernel(x_ref, enc_wih_ref, enc_whh_ref, enc_b_ref,
                    emb_ref, dec_wih_ref, dec_fused_ref, dec_b_ref, fc_b_ref,
                    out_ref, *, batch, hist_len, hidden, future_len, output_size):
    B, S, H, O = batch, hist_len, hidden, output_size
    f32, bf16 = jnp.float32, jnp.bfloat16

    # ---- weights: load once; matmul operands in bf16 (f32 MXU accumulation) ----
    enc_whh = enc_whh_ref[...].astype(bf16)                    # (H, 4H)
    dec_fused = dec_fused_ref[...].astype(bf16)                # (H, 4H+O) = [W_hh_dec | W_fc]

    # ---- hoisted bias broadcast (only per-step bias add left is fc_b) ----
    fc_b = jnp.broadcast_to(fc_b_ref[...], (B, O))

    # ---- encoder input projection hoisted off the recurrence (one MXU call),
    #      enc bias pre-added once, reshaped time-major for leading-axis reads ----
    xproj = (jnp.dot(x_ref[...].astype(bf16), enc_wih_ref[...].astype(bf16),
                     preferred_element_type=f32)
             + jnp.broadcast_to(enc_b_ref[...], (S * B, 4 * H)))
    xproj = xproj.reshape(S, B, 4 * H)                         # (S, B, 4H) f32

    # ---- embedding table fused into the decoder input projection, dec bias
    #      folded in; kept bf16 so the per-step one-hot select is one MXU pass ----
    emb_dec = (jnp.dot(emb_ref[...].astype(bf16), dec_wih_ref[...].astype(bf16),
                       preferred_element_type=f32)
               + jnp.broadcast_to(dec_b_ref[...], (O, 4 * H))).astype(bf16)   # (O, 4H)

    h = jnp.zeros((B, H), f32)
    c = jnp.zeros((B, H), f32)

    # ---- encoder recurrence (fully unrolled, small static trip count) ----
    for t in range(S):
        z = jnp.dot(h.astype(bf16), enc_whh, preferred_element_type=f32) + xproj[t]
        h, c = _gates(z, c)

    # ---- decoder: greedy autoregressive rollout (fully unrolled) ----
    # y_prev = zeros(long) -> embedding row 0 -> fused-projection row 0
    # (dec bias already folded in, bf16-rounded like every later selected row).
    dec_in = jnp.broadcast_to(emb_dec[0:1, :].astype(f32), (B, 4 * H))
    rec = jnp.dot(h.astype(bf16), dec_fused, preferred_element_type=f32)[:, :4 * H]
    for t in range(future_len):
        h, c = _gates(rec + dec_in, c)
        # single fused matmul: next-step recurrent term + this step's logits
        fused = jnp.dot(h.astype(bf16), dec_fused, preferred_element_type=f32)   # (B, 4H+O)
        rec = fused[:, :4 * H]
        logits = fused[:, 4 * H:] + fc_b
        out_ref[t] = logits                                    # per-step writeback
        if t + 1 < future_len:
            onehot = _argmax_onehot(logits, O)                 # (B, O) bf16, exact 0/1
            dec_in = jnp.dot(onehot, emb_dec, preferred_element_type=f32)


def autoregressive_lstm_forward(params, x_hist, future_len):
    """x_hist: (B, S, I) float32.  Returns (B, T_fut, O) (squeezed if B==1)."""
    B, S, I = x_hist.shape
    H = params["enc_whh_t"].shape[0]
    O = params["embed"].shape[0]

    # Time-major flatten (B,S,I) -> (S*B, I) so the encoder input projection is
    # one well-shaped MXU matmul inside the kernel.
    x_flat = jnp.transpose(x_hist, (1, 0, 2)).reshape(S * B, I).astype(jnp.float32)

    # Fuse decoder recurrent weight with the output head once (wrapper side, free):
    # per decode step a single h @ [W_hh_dec | W_fc] yields both the next
    # recurrent term and the logits.
    dec_fused = jnp.concatenate([params["dec_whh_t"], params["fc_w_t"]], axis=1)

    kernel = functools.partial(_ar_lstm_kernel, batch=B, hist_len=S, hidden=H,
                               future_len=future_len, output_size=O)
    vmem = pl.BlockSpec(memory_space=pltpu.MemorySpace.VMEM)

    out_tm = pl.pallas_call(
        kernel,
        out_shape=jax.ShapeDtypeStruct((future_len, B, O), jnp.float32),
        in_specs=[vmem] * 9,
        out_specs=vmem,
    )(x_flat,
      params["enc_wih_t"], params["enc_whh_t"], params["enc_b"],
      params["embed"], params["dec_wih_t"], dec_fused,
      params["dec_b"], params["fc_b"])

    preds = jnp.transpose(out_tm, (1, 0, 2))                   # (B, T, O)
    if B == 1:                                                 # torch .squeeze(0)
        preds = preds[0]
    return preds


def init_params(key, input_size, hidden, output_size, embed_dim):
    """Deterministic synthetic parameters (shapes from the nn.Module init)."""
    ks = jax.random.split(key, 9)
    bound = 1.0 / jnp.sqrt(jnp.float32(hidden))
    u = lambda k, shape: jax.random.uniform(k, shape, jnp.float32, -bound, bound)
    return dict(
        enc_wih_t=u(ks[0], (input_size, 4 * hidden)),    # W_ih^T
        enc_whh_t=u(ks[1], (hidden, 4 * hidden)),        # W_hh^T
        enc_b=u(ks[2], (1, 4 * hidden)),                 # b_ih + b_hh folded
        embed=jax.random.normal(ks[3], (output_size, embed_dim), jnp.float32),
        dec_wih_t=u(ks[4], (embed_dim, 4 * hidden)),
        dec_whh_t=u(ks[5], (hidden, 4 * hidden)),
        dec_b=u(ks[6], (1, 4 * hidden)),
        fc_w_t=u(ks[7], (hidden, output_size)),          # Linear weight^T
        fc_b=u(ks[8], (1, output_size)),
    )


def reference_forward(params, x_hist, future_len):
    """Pure-JAX reference mirroring the PyTorch forward (greedy path).

    Uses the same numerics as the kernel (bf16 matmul operands, f32
    accumulation, f32 gate math, bf16-rounded fused decoder-input table) so the
    autoregressive argmax feedback is deterministic between kernel and
    reference."""
    B, S, _ = x_hist.shape
    H = params["enc_whh_t"].shape[0]
    bf16, f32 = jnp.bfloat16, jnp.float32

    def bdot(a, b):
        return jnp.dot(a.astype(bf16), b.astype(bf16), preferred_element_type=f32)

    h = jnp.zeros((B, H), f32)
    c = jnp.zeros((B, H), f32)
    for t in range(S):
        xin = bdot(x_hist[:, t, :], params["enc_wih_t"]) + params["enc_b"]
        h, c = _gates(bdot(h, params["enc_whh_t"]) + xin, c)

    def dec_input(y):
        row = bdot(params["embed"][y], params["dec_wih_t"]) + params["dec_b"]
        return row.astype(bf16).astype(f32)   # kernel keeps the fused table in bf16

    y_prev = jnp.zeros((B,), jnp.int32)
    dec_in = dec_input(y_prev)
    preds = []
    for _ in range(future_len):
        h, c = _gates(bdot(h, params["dec_whh_t"]) + dec_in, c)
        logits = bdot(h, params["fc_w_t"]) + params["fc_b"]
        preds.append(logits)
        y_prev = jnp.argmax(logits, axis=1)
        dec_in = dec_input(y_prev)
    out = jnp.stack(preds, axis=1)
    if B == 1:
        out = out[0]
    return out


if __name__ == "__main__":
    B, S, I = 2, 8, 4          # batch, history length, input_size
    H, O, E = 32, 16, 8        # hidden_size, output_size (vocab), embed_dim
    T_FUT = 5                  # future_len

    key = jax.random.PRNGKey(0)
    k_param, k_x = jax.random.split(key)
    params = init_params(k_param, I, H, O, E)
    x_hist = jax.random.normal(k_x, (B, S, I), jnp.float32)

    preds = autoregressive_lstm_forward(params, x_hist, T_FUT)
    preds = jax.block_until_ready(preds)

    assert preds.shape == (B, T_FUT, O), preds.shape
    assert bool(jnp.all(jnp.isfinite(preds)))

    ref = jax.block_until_ready(reference_forward(params, x_hist, T_FUT))
    assert bool(jnp.allclose(preds, ref, rtol=1e-3, atol=1e-3)), (
        float(jnp.max(jnp.abs(preds - ref))))

    print("KERNEL_OK")
</pallas_src>

<mosaic_0001>
module attributes {stable_mosaic.version = 11 : i64} {
  func.func @_ar_lstm_kernel(%arg0: memref<16x4xf32, #tpu.memory_space<vmem>>, %arg1: memref<4x128xf32, #tpu.memory_space<vmem>>, %arg2: memref<32x128xf32, #tpu.memory_space<vmem>>, %arg3: memref<1x128xf32, #tpu.memory_space<vmem>>, %arg4: memref<16x8xf32, #tpu.memory_space<vmem>>, %arg5: memref<8x128xf32, #tpu.memory_space<vmem>>, %arg6: memref<32x144xf32, #tpu.memory_space<vmem>>, %arg7: memref<1x128xf32, #tpu.memory_space<vmem>>, %arg8: memref<1x16xf32, #tpu.memory_space<vmem>>, %arg9: memref<5x2x16xf32, #tpu.memory_space<vmem>>) attributes {dimension_semantics = [], scalar_prefetch = 0 : i64, scratch_operands = 0 : i64, tpu.core_type = #tpu.core_type<tc>} {
    %c0 = arith.constant 0 : index
    %c0_0 = arith.constant 0 : index
    %0 = vector.load %arg2[%c0, %c0_0] : memref<32x128xf32, #tpu.memory_space<vmem>>, vector<32x128xf32>
    %1 = arith.truncf %0 : vector<32x128xf32> to vector<32x128xbf16>
    %c0_1 = arith.constant 0 : index
    %c0_2 = arith.constant 0 : index
    %2 = vector.load %arg6[%c0_1, %c0_2] : memref<32x144xf32, #tpu.memory_space<vmem>>, vector<32x144xf32>
    %3 = arith.truncf %2 : vector<32x144xf32> to vector<32x144xbf16>
    %c0_3 = arith.constant 0 : index
    %c0_4 = arith.constant 0 : index
    %4 = vector.load %arg8[%c0_3, %c0_4] : memref<1x16xf32, #tpu.memory_space<vmem>>, vector<1x16xf32>
    %5 = vector.shape_cast %4 : vector<1x16xf32> to vector<1x16xf32>
    %6 = vector.broadcast %5 : vector<1x16xf32> to vector<2x16xf32>
    %c0_5 = arith.constant 0 : index
    %c0_6 = arith.constant 0 : index
    %7 = vector.load %arg0[%c0_5, %c0_6] : memref<16x4xf32, #tpu.memory_space<vmem>>, vector<16x4xf32>
    %8 = arith.truncf %7 : vector<16x4xf32> to vector<16x4xbf16>
    %c0_7 = arith.constant 0 : index
    %c0_8 = arith.constant 0 : index
    %9 = vector.load %arg1[%c0_7, %c0_8] : memref<4x128xf32, #tpu.memory_space<vmem>>, vector<4x128xf32>
    %10 = arith.truncf %9 : vector<4x128xf32> to vector<4x128xbf16>
    %cst = arith.constant dense<0.000000e+00> : vector<16x128xf32>
    %11 = tpu.matmul %8, %10, %cst {dimension_numbers = #tpu.dot_dimension_numbers<[1], [0], [0], [1], [0, 0, 1, 1], [], []>} : vector<16x4xbf16>, vector<4x128xbf16>, vector<16x128xf32> -> vector<16x128xf32>
    %c0_9 = arith.constant 0 : index
    %c0_10 = arith.constant 0 : index
    %12 = vector.load %arg3[%c0_9, %c0_10] : memref<1x128xf32, #tpu.memory_space<vmem>>, vector<1x128xf32>
    %13 = vector.shape_cast %12 : vector<1x128xf32> to vector<1x128xf32>
    %14 = vector.broadcast %13 : vector<1x128xf32> to vector<16x128xf32>
    %15 = arith.addf %11, %14 : vector<16x128xf32>
    %16 = vector.shape_cast %15 : vector<16x128xf32> to vector<8x2x128xf32>
    %c0_11 = arith.constant 0 : index
    %c0_12 = arith.constant 0 : index
    %17 = vector.load %arg4[%c0_11, %c0_12] : memref<16x8xf32, #tpu.memory_space<vmem>>, vector<16x8xf32>
    %18 = arith.truncf %17 : vector<16x8xf32> to vector<16x8xbf16>
    %c0_13 = arith.constant 0 : index
    %c0_14 = arith.constant 0 : index
    %19 = vector.load %arg5[%c0_13, %c0_14] : memref<8x128xf32, #tpu.memory_space<vmem>>, vector<8x128xf32>
    %20 = arith.truncf %19 : vector<8x128xf32> to vector<8x128xbf16>
    %cst_15 = arith.constant dense<0.000000e+00> : vector<16x128xf32>
    %21 = tpu.matmul %18, %20, %cst_15 {dimension_numbers = #tpu.dot_dimension_numbers<[1], [0], [0], [1], [0, 0, 1, 1], [], []>} : vector<16x8xbf16>, vector<8x128xbf16>, vector<16x128xf32> -> vector<16x128xf32>
    %c0_16 = arith.constant 0 : index
    %c0_17 = arith.constant 0 : index
    %22 = vector.load %arg7[%c0_16, %c0_17] : memref<1x128xf32, #tpu.memory_space<vmem>>, vector<1x128xf32>
    %23 = vector.shape_cast %22 : vector<1x128xf32> to vector<1x128xf32>
    %24 = vector.broadcast %23 : vector<1x128xf32> to vector<16x128xf32>
    %25 = arith.addf %21, %24 : vector<16x128xf32>
    %26 = arith.truncf %25 : vector<16x128xf32> to vector<16x128xbf16>
    %cst_18 = arith.constant 0.000000e+00 : f32
    %27 = vector.broadcast %cst_18 : f32 to vector<2x32xf32>
    %cst_19 = arith.constant 0.000000e+00 : f32
    %28 = vector.broadcast %cst_19 : f32 to vector<2x32xf32>
    %29 = arith.truncf %27 : vector<2x32xf32> to vector<2x32xbf16>
    %cst_20 = arith.constant dense<0.000000e+00> : vector<2x128xf32>
    %30 = tpu.matmul %29, %1, %cst_20 {dimension_numbers = #tpu.dot_dimension_numbers<[1], [0], [0], [1], [0, 0, 1, 1], [], []>} : vector<2x32xbf16>, vector<32x128xbf16>, vector<2x128xf32> -> vector<2x128xf32>
    %31 = vector.extract_strided_slice %16 {offsets = [0, 0, 0], sizes = [1, 2, 128], strides = [1, 1, 1]} : vector<8x2x128xf32> to vector<1x2x128xf32>
    %32 = vector.shape_cast %31 : vector<1x2x128xf32> to vector<2x128xf32>
    %33 = arith.addf %30, %32 : vector<2x128xf32>
    %34 = arith.negf %33 : vector<2x128xf32>
    %35 = math.exp %34 : vector<2x128xf32>
    %cst_21 = arith.constant 1.000000e+00 : f32
    %36 = vector.broadcast %cst_21 : f32 to vector<2x128xf32>
    %37 = arith.addf %36, %35 : vector<2x128xf32>
    %38 = arith.divf %36, %37 : vector<2x128xf32>
    %39 = math.tanh %33 : vector<2x128xf32>
    %40 = vector.extract_strided_slice %38 {offsets = [0, 0], sizes = [2, 32], strides = [1, 1]} : vector<2x128xf32> to vector<2x32xf32>
    %41 = vector.extract_strided_slice %38 {offsets = [0, 32], sizes = [2, 32], strides = [1, 1]} : vector<2x128xf32> to vector<2x32xf32>
    %42 = vector.extract_strided_slice %39 {offsets = [0, 64], sizes = [2, 32], strides = [1, 1]} : vector<2x128xf32> to vector<2x32xf32>
    %43 = vector.extract_strided_slice %38 {offsets = [0, 96], sizes = [2, 32], strides = [1, 1]} : vector<2x128xf32> to vector<2x32xf32>
    %44 = arith.mulf %41, %28 : vector<2x32xf32>
    %45 = arith.mulf %40, %42 : vector<2x32xf32>
    %46 = arith.addf %44, %45 : vector<2x32xf32>
    %47 = math.tanh %46 : vector<2x32xf32>
    %48 = arith.mulf %43, %47 : vector<2x32xf32>
    %49 = arith.truncf %48 : vector<2x32xf32> to vector<2x32xbf16>
    %cst_22 = arith.constant dense<0.000000e+00> : vector<2x128xf32>
    %50 = tpu.matmul %49, %1, %cst_22 {dimension_numbers = #tpu.dot_dimension_numbers<[1], [0], [0], [1], [0, 0, 1, 1], [], []>} : vector<2x32xbf16>, vector<32x128xbf16>, vector<2x128xf32> -> vector<2x128xf32>
    %51 = vector.extract_strided_slice %16 {offsets = [1, 0, 0], sizes = [1, 2, 128], strides = [1, 1, 1]} : vector<8x2x128xf32> to vector<1x2x128xf32>
    %52 = vector.shape_cast %51 : vector<1x2x128xf32> to vector<2x128xf32>
    %53 = arith.addf %50, %52 : vector<2x128xf32>
    %54 = arith.negf %53 : vector<2x128xf32>
    %55 = math.exp %54 : vector<2x128xf32>
    %cst_23 = arith.constant 1.000000e+00 : f32
    %56 = vector.broadcast %cst_23 : f32 to vector<2x128xf32>
    %57 = arith.addf %56, %55 : vector<2x128xf32>
    %58 = arith.divf %56, %57 : vector<2x128xf32>
    %59 = math.tanh %53 : vector<2x128xf32>
    %60 = vector.extract_strided_slice %58 {offsets = [0, 0], sizes = [2, 32], strides = [1, 1]} : vector<2x128xf32> to vector<2x32xf32>
    %61 = vector.extract_strided_slice %58 {offsets = [0, 32], sizes = [2, 32], strides = [1, 1]} : vector<2x128xf32> to vector<2x32xf32>
    %62 = vector.extract_strided_slice %59 {offsets = [0, 64], sizes = [2, 32], strides = [1, 1]} : vector<2x128xf32> to vector<2x32xf32>
    %63 = vector.extract_strided_slice %58 {offsets = [0, 96], sizes = [2, 32], strides = [1, 1]} : vector<2x128xf32> to vector<2x32xf32>
    %64 = arith.mulf %61, %46 : vector<2x32xf32>
    %65 = arith.mulf %60, %62 : vector<2x32xf32>
    %66 = arith.addf %64, %65 : vector<2x32xf32>
    %67 = math.tanh %66 : vector<2x32xf32>
    %68 = arith.mulf %63, %67 : vector<2x32xf32>
    %69 = arith.truncf %68 : vector<2x32xf32> to vector<2x32xbf16>
    %cst_24 = arith.constant dense<0.000000e+00> : vector<2x128xf32>
    %70 = tpu.matmul %69, %1, %cst_24 {dimension_numbers = #tpu.dot_dimension_numbers<[1], [0], [0], [1], [0, 0, 1, 1], [], []>} : vector<2x32xbf16>, vector<32x128xbf16>, vector<2x128xf32> -> vector<2x128xf32>
    %71 = vector.extract_strided_slice %16 {offsets = [2, 0, 0], sizes = [1, 2, 128], strides = [1, 1, 1]} : vector<8x2x128xf32> to vector<1x2x128xf32>
    %72 = vector.shape_cast %71 : vector<1x2x128xf32> to vector<2x128xf32>
    %73 = arith.addf %70, %72 : vector<2x128xf32>
    %74 = arith.negf %73 : vector<2x128xf32>
    %75 = math.exp %74 : vector<2x128xf32>
    %cst_25 = arith.constant 1.000000e+00 : f32
    %76 = vector.broadcast %cst_25 : f32 to vector<2x128xf32>
    %77 = arith.addf %76, %75 : vector<2x128xf32>
    %78 = arith.divf %76, %77 : vector<2x128xf32>
    %79 = math.tanh %73 : vector<2x128xf32>
    %80 = vector.extract_strided_slice %78 {offsets = [0, 0], sizes = [2, 32], strides = [1, 1]} : vector<2x128xf32> to vector<2x32xf32>
    %81 = vector.extract_strided_slice %78 {offsets = [0, 32], sizes = [2, 32], strides = [1, 1]} : vector<2x128xf32> to vector<2x32xf32>
    %82 = vector.extract_strided_slice %79 {offsets = [0, 64], sizes = [2, 32], strides = [1, 1]} : vector<2x128xf32> to vector<2x32xf32>
    %83 = vector.extract_strided_slice %78 {offsets = [0, 96], sizes = [2, 32], strides = [1, 1]} : vector<2x128xf32> to vector<2x32xf32>
    %84 = arith.mulf %81, %66 : vector<2x32xf32>
    %85 = arith.mulf %80, %82 : vector<2x32xf32>
    %86 = arith.addf %84, %85 : vector<2x32xf32>
    %87 = math.tanh %86 : vector<2x32xf32>
    %88 = arith.mulf %83, %87 : vector<2x32xf32>
    %89 = arith.truncf %88 : vector<2x32xf32> to vector<2x32xbf16>
    %cst_26 = arith.constant dense<0.000000e+00> : vector<2x128xf32>
    %90 = tpu.matmul %89, %1, %cst_26 {dimension_numbers = #tpu.dot_dimension_numbers<[1], [0], [0], [1], [0, 0, 1, 1], [], []>} : vector<2x32xbf16>, vector<32x128xbf16>, vector<2x128xf32> -> vector<2x128xf32>
    %91 = vector.extract_strided_slice %16 {offsets = [3, 0, 0], sizes = [1, 2, 128], strides = [1, 1, 1]} : vector<8x2x128xf32> to vector<1x2x128xf32>
    %92 = vector.shape_cast %91 : vector<1x2x128xf32> to vector<2x128xf32>
    %93 = arith.addf %90, %92 : vector<2x128xf32>
    %94 = arith.negf %93 : vector<2x128xf32>
    %95 = math.exp %94 : vector<2x128xf32>
    %cst_27 = arith.constant 1.000000e+00 : f32
    %96 = vector.broadcast %cst_27 : f32 to vector<2x128xf32>
    %97 = arith.addf %96, %95 : vector<2x128xf32>
    %98 = arith.divf %96, %97 : vector<2x128xf32>
    %99 = math.tanh %93 : vector<2x128xf32>
    %100 = vector.extract_strided_slice %98 {offsets = [0, 0], sizes = [2, 32], strides = [1, 1]} : vector<2x128xf32> to vector<2x32xf32>
    %101 = vector.extract_strided_slice %98 {offsets = [0, 32], sizes = [2, 32], strides = [1, 1]} : vector<2x128xf32> to vector<2x32xf32>
    %102 = vector.extract_strided_slice %99 {offsets = [0, 64], sizes = [2, 32], strides = [1, 1]} : vector<2x128xf32> to vector<2x32xf32>
    %103 = vector.extract_strided_slice %98 {offsets = [0, 96], sizes = [2, 32], strides = [1, 1]} : vector<2x128xf32> to vector<2x32xf32>
    %104 = arith.mulf %101, %86 : vector<2x32xf32>
    %105 = arith.mulf %100, %102 : vector<2x32xf32>
    %106 = arith.addf %104, %105 : vector<2x32xf32>
    %107 = math.tanh %106 : vector<2x32xf32>
    %108 = arith.mulf %103, %107 : vector<2x32xf32>
    %109 = arith.truncf %108 : vector<2x32xf32> to vector<2x32xbf16>
    %cst_28 = arith.constant dense<0.000000e+00> : vector<2x128xf32>
    %110 = tpu.matmul %109, %1, %cst_28 {dimension_numbers = #tpu.dot_dimension_numbers<[1], [0], [0], [1], [0, 0, 1, 1], [], []>} : vector<2x32xbf16>, vector<32x128xbf16>, vector<2x128xf32> -> vector<2x128xf32>
    %111 = vector.extract_strided_slice %16 {offsets = [4, 0, 0], sizes = [1, 2, 128], strides = [1, 1, 1]} : vector<8x2x128xf32> to vector<1x2x128xf32>
    %112 = vector.shape_cast %111 : vector<1x2x128xf32> to vector<2x128xf32>
    %113 = arith.addf %110, %112 : vector<2x128xf32>
    %114 = arith.negf %113 : vector<2x128xf32>
    %115 = math.exp %114 : vector<2x128xf32>
    %cst_29 = arith.constant 1.000000e+00 : f32
    %116 = vector.broadcast %cst_29 : f32 to vector<2x128xf32>
    %117 = arith.addf %116, %115 : vector<2x128xf32>
    %118 = arith.divf %116, %117 : vector<2x128xf32>
    %119 = math.tanh %113 : vector<2x128xf32>
    %120 = vector.extract_strided_slice %118 {offsets = [0, 0], sizes = [2, 32], strides = [1, 1]} : vector<2x128xf32> to vector<2x32xf32>
    %121 = vector.extract_strided_slice %118 {offsets = [0, 32], sizes = [2, 32], strides = [1, 1]} : vector<2x128xf32> to vector<2x32xf32>
    %122 = vector.extract_strided_slice %119 {offsets = [0, 64], sizes = [2, 32], strides = [1, 1]} : vector<2x128xf32> to vector<2x32xf32>
    %123 = vector.extract_strided_slice %118 {offsets = [0, 96], sizes = [2, 32], strides = [1, 1]} : vector<2x128xf32> to vector<2x32xf32>
    %124 = arith.mulf %121, %106 : vector<2x32xf32>
    %125 = arith.mulf %120, %122 : vector<2x32xf32>
    %126 = arith.addf %124, %125 : vector<2x32xf32>
    %127 = math.tanh %126 : vector<2x32xf32>
    %128 = arith.mulf %123, %127 : vector<2x32xf32>
    %129 = arith.truncf %128 : vector<2x32xf32> to vector<2x32xbf16>
    %cst_30 = arith.constant dense<0.000000e+00> : vector<2x128xf32>
    %130 = tpu.matmul %129, %1, %cst_30 {dimension_numbers = #tpu.dot_dimension_numbers<[1], [0], [0], [1], [0, 0, 1, 1], [], []>} : vector<2x32xbf16>, vector<32x128xbf16>, vector<2x128xf32> -> vector<2x128xf32>
    %131 = vector.extract_strided_slice %16 {offsets = [5, 0, 0], sizes = [1, 2, 128], strides = [1, 1, 1]} : vector<8x2x128xf32> to vector<1x2x128xf32>
    %132 = vector.shape_cast %131 : vector<1x2x128xf32> to vector<2x128xf32>
    %133 = arith.addf %130, %132 : vector<2x128xf32>
    %134 = arith.negf %133 : vector<2x128xf32>
    %135 = math.exp %134 : vector<2x128xf32>
    %cst_31 = arith.constant 1.000000e+00 : f32
    %136 = vector.broadcast %cst_31 : f32 to vector<2x128xf32>
    %137 = arith.addf %136, %135 : vector<2x128xf32>
    %138 = arith.divf %136, %137 : vector<2x128xf32>
    %139 = math.tanh %133 : vector<2x128xf32>
    %140 = vector.extract_strided_slice %138 {offsets = [0, 0], sizes = [2, 32], strides = [1, 1]} : vector<2x128xf32> to vector<2x32xf32>
    %141 = vector.extract_strided_slice %138 {offsets = [0, 32], sizes = [2, 32], strides = [1, 1]} : vector<2x128xf32> to vector<2x32xf32>
    %142 = vector.extract_strided_slice %139 {offsets = [0, 64], sizes = [2, 32], strides = [1, 1]} : vector<2x128xf32> to vector<2x32xf32>
    %143 = vector.extract_strided_slice %138 {offsets = [0, 96], sizes = [2, 32], strides = [1, 1]} : vector<2x128xf32> to vector<2x32xf32>
    %144 = arith.mulf %141, %126 : vector<2x32xf32>
    %145 = arith.mulf %140, %142 : vector<2x32xf32>
    %146 = arith.addf %144, %145 : vector<2x32xf32>
    %147 = math.tanh %146 : vector<2x32xf32>
    %148 = arith.mulf %143, %147 : vector<2x32xf32>
    %149 = arith.truncf %148 : vector<2x32xf32> to vector<2x32xbf16>
    %cst_32 = arith.constant dense<0.000000e+00> : vector<2x128xf32>
    %150 = tpu.matmul %149, %1, %cst_32 {dimension_numbers = #tpu.dot_dimension_numbers<[1], [0], [0], [1], [0, 0, 1, 1], [], []>} : vector<2x32xbf16>, vector<32x128xbf16>, vector<2x128xf32> -> vector<2x128xf32>
    %151 = vector.extract_strided_slice %16 {offsets = [6, 0, 0], sizes = [1, 2, 128], strides = [1, 1, 1]} : vector<8x2x128xf32> to vector<1x2x128xf32>
    %152 = vector.shape_cast %151 : vector<1x2x128xf32> to vector<2x128xf32>
    %153 = arith.addf %150, %152 : vector<2x128xf32>
    %154 = arith.negf %153 : vector<2x128xf32>
    %155 = math.exp %154 : vector<2x128xf32>
    %cst_33 = arith.constant 1.000000e+00 : f32
    %156 = vector.broadcast %cst_33 : f32 to vector<2x128xf32>
    %157 = arith.addf %156, %155 : vector<2x128xf32>
    %158 = arith.divf %156, %157 : vector<2x128xf32>
    %159 = math.tanh %153 : vector<2x128xf32>
    %160 = vector.extract_strided_slice %158 {offsets = [0, 0], sizes = [2, 32], strides = [1, 1]} : vector<2x128xf32> to vector<2x32xf32>
    %161 = vector.extract_strided_slice %158 {offsets = [0, 32], sizes = [2, 32], strides = [1, 1]} : vector<2x128xf32> to vector<2x32xf32>
    %162 = vector.extract_strided_slice %159 {offsets = [0, 64], sizes = [2, 32], strides = [1, 1]} : vector<2x128xf32> to vector<2x32xf32>
    %163 = vector.extract_strided_slice %158 {offsets = [0, 96], sizes = [2, 32], strides = [1, 1]} : vector<2x128xf32> to vector<2x32xf32>
    %164 = arith.mulf %161, %146 : vector<2x32xf32>
    %165 = arith.mulf %160, %162 : vector<2x32xf32>
    %166 = arith.addf %164, %165 : vector<2x32xf32>
    %167 = math.tanh %166 : vector<2x32xf32>
    %168 = arith.mulf %163, %167 : vector<2x32xf32>
    %169 = arith.truncf %168 : vector<2x32xf32> to vector<2x32xbf16>
    %cst_34 = arith.constant dense<0.000000e+00> : vector<2x128xf32>
    %170 = tpu.matmul %169, %1, %cst_34 {dimension_numbers = #tpu.dot_dimension_numbers<[1], [0], [0], [1], [0, 0, 1, 1], [], []>} : vector<2x32xbf16>, vector<32x128xbf16>, vector<2x128xf32> -> vector<2x128xf32>
    %171 = vector.extract_strided_slice %16 {offsets = [7, 0, 0], sizes = [1, 2, 128], strides = [1, 1, 1]} : vector<8x2x128xf32> to vector<1x2x128xf32>
    %172 = vector.shape_cast %171 : vector<1x2x128xf32> to vector<2x128xf32>
    %173 = arith.addf %170, %172 : vector<2x128xf32>
    %174 = arith.negf %173 : vector<2x128xf32>
    %175 = math.exp %174 : vector<2x128xf32>
    %cst_35 = arith.constant 1.000000e+00 : f32
    %176 = vector.broadcast %cst_35 : f32 to vector<2x128xf32>
    %177 = arith.addf %176, %175 : vector<2x128xf32>
    %178 = arith.divf %176, %177 : vector<2x128xf32>
    %179 = math.tanh %173 : vector<2x128xf32>
    %180 = vector.extract_strided_slice %178 {offsets = [0, 0], sizes = [2, 32], strides = [1, 1]} : vector<2x128xf32> to vector<2x32xf32>
    %181 = vector.extract_strided_slice %178 {offsets = [0, 32], sizes = [2, 32], strides = [1, 1]} : vector<2x128xf32> to vector<2x32xf32>
    %182 = vector.extract_strided_slice %179 {offsets = [0, 64], sizes = [2, 32], strides = [1, 1]} : vector<2x128xf32> to vector<2x32xf32>
    %183 = vector.extract_strided_slice %178 {offsets = [0, 96], sizes = [2, 32], strides = [1, 1]} : vector<2x128xf32> to vector<2x32xf32>
    %184 = arith.mulf %181, %166 : vector<2x32xf32>
    %185 = arith.mulf %180, %182 : vector<2x32xf32>
    %186 = arith.addf %184, %185 : vector<2x32xf32>
    %187 = math.tanh %186 : vector<2x32xf32>
    %188 = arith.mulf %183, %187 : vector<2x32xf32>
    %189 = vector.extract_strided_slice %26 {offsets = [0, 0], sizes = [1, 128], strides = [1, 1]} : vector<16x128xbf16> to vector<1x128xbf16>
    %190 = arith.extf %189 : vector<1x128xbf16> to vector<1x128xf32>
    %191 = vector.shape_cast %190 : vector<1x128xf32> to vector<1x128xf32>
    %192 = vector.broadcast %191 : vector<1x128xf32> to vector<2x128xf32>
    %193 = arith.truncf %188 : vector<2x32xf32> to vector<2x32xbf16>
    %cst_36 = arith.constant dense<0.000000e+00> : vector<2x144xf32>
    %194 = tpu.matmul %193, %3, %cst_36 {dimension_numbers = #tpu.dot_dimension_numbers<[1], [0], [0], [1], [0, 0, 1, 1], [], []>} : vector<2x32xbf16>, vector<32x144xbf16>, vector<2x144xf32> -> vector<2x144xf32>
    %195 = vector.extract_strided_slice %194 {offsets = [0, 0], sizes = [2, 128], strides = [1, 1]} : vector<2x144xf32> to vector<2x128xf32>
    %196 = arith.addf %195, %192 : vector<2x128xf32>
    %197 = arith.negf %196 : vector<2x128xf32>
    %198 = math.exp %197 : vector<2x128xf32>
    %cst_37 = arith.constant 1.000000e+00 : f32
    %199 = vector.broadcast %cst_37 : f32 to vector<2x128xf32>
    %200 = arith.addf %199, %198 : vector<2x128xf32>
    %201 = arith.divf %199, %200 : vector<2x128xf32>
    %202 = math.tanh %196 : vector<2x128xf32>
    %203 = vector.extract_strided_slice %201 {offsets = [0, 0], sizes = [2, 32], strides = [1, 1]} : vector<2x128xf32> to vector<2x32xf32>
    %204 = vector.extract_strided_slice %201 {offsets = [0, 32], sizes = [2, 32], strides = [1, 1]} : vector<2x128xf32> to vector<2x32xf32>
    %205 = vector.extract_strided_slice %202 {offsets = [0, 64], sizes = [2, 32], strides = [1, 1]} : vector<2x128xf32> to vector<2x32xf32>
    %206 = vector.extract_strided_slice %201 {offsets = [0, 96], sizes = [2, 32], strides = [1, 1]} : vector<2x128xf32> to vector<2x32xf32>
    %207 = arith.mulf %204, %186 : vector<2x32xf32>
    %208 = arith.mulf %203, %205 : vector<2x32xf32>
    %209 = arith.addf %207, %208 : vector<2x32xf32>
    %210 = math.tanh %209 : vector<2x32xf32>
    %211 = arith.mulf %206, %210 : vector<2x32xf32>
    %212 = arith.truncf %211 : vector<2x32xf32> to vector<2x32xbf16>
    %cst_38 = arith.constant dense<0.000000e+00> : vector<2x144xf32>
    %213 = tpu.matmul %212, %3, %cst_38 {dimension_numbers = #tpu.dot_dimension_numbers<[1], [0], [0], [1], [0, 0, 1, 1], [], []>} : vector<2x32xbf16>, vector<32x144xbf16>, vector<2x144xf32> -> vector<2x144xf32>
    %214 = vector.extract_strided_slice %213 {offsets = [0, 0], sizes = [2, 128], strides = [1, 1]} : vector<2x144xf32> to vector<2x128xf32>
    %215 = vector.extract_strided_slice %213 {offsets = [0, 128], sizes = [2, 16], strides = [1, 1]} : vector<2x144xf32> to vector<2x16xf32>
    %216 = arith.addf %215, %6 : vector<2x16xf32>
    %c0_39 = arith.constant 0 : index
    %c0_40 = arith.constant 0 : index
    %c0_41 = arith.constant 0 : index
    %217 = vector.load %arg9[%c0_39, %c0_40, %c0_41] : memref<5x2x16xf32, #tpu.memory_space<vmem>>, vector<1x2x16xf32>
    %218 = vector.shape_cast %217 : vector<1x2x16xf32> to vector<2x16xf32>
    %219 = vector.shape_cast %216 : vector<2x16xf32> to vector<1x2x16xf32>
    tpu.vector_store %arg9[%c0_39, %c0_40, %c0_41], %219 {strides = array<i32>} : memref<5x2x16xf32, #tpu.memory_space<vmem>>, vector<1x2x16xf32>,
    %220 = tpu.iota {dimensions = array<i32: 1>} : vector<2x16xi32>
    %cst_42 = arith.constant dense<0xFF800000> : vector<2xf32>
    %221 = vector.multi_reduction <maximumf>, %216, %cst_42 [1] : vector<2x16xf32> to vector<2xf32>
    %222 = vector.shape_cast %221 : vector<2xf32> to vector<2x1xf32>
    %223 = vector.broadcast %222 : vector<2x1xf32> to vector<2x16xf32>
    %224 = arith.cmpf oge, %216, %223 : vector<2x16xf32>
    %c16_i32 = arith.constant 16 : i32
    %225 = vector.broadcast %c16_i32 : i32 to vector<2x16xi32>
    %226 = arith.select %224, %220, %225 : vector<2x16xi1>, vector<2x16xi32>
    %cst_43 = arith.constant dense<2147483647> : vector<2xi32>
    %227 = vector.multi_reduction <minsi>, %226, %cst_43 [1] : vector<2x16xi32> to vector<2xi32>
    %228 = vector.shape_cast %227 : vector<2xi32> to vector<2x1xi32>
    %229 = vector.broadcast %228 : vector<2x1xi32> to vector<2x16xi32>
    %230 = arith.cmpi eq, %220, %229 : vector<2x16xi32>
    %231 = arith.extui %230 : vector<2x16xi1> to vector<2x16xi32>
    %232 = arith.sitofp %231 : vector<2x16xi32> to vector<2x16xf32>
    %233 = arith.truncf %232 : vector<2x16xf32> to vector<2x16xbf16>
    %cst_44 = arith.constant dense<0.000000e+00> : vector<2x128xf32>
    %234 = tpu.matmul %233, %26, %cst_44 {dimension_numbers = #tpu.dot_dimension_numbers<[1], [0], [0], [1], [0, 0, 1, 1], [], []>} : vector<2x16xbf16>, vector<16x128xbf16>, vector<2x128xf32> -> vector<2x128xf32>
    %235 = arith.addf %214, %234 : vector<2x128xf32>
    %236 = arith.negf %235 : vector<2x128xf32>
    %237 = math.exp %236 : vector<2x128xf32>
    %cst_45 = arith.constant 1.000000e+00 : f32
    %238 = vector.broadcast %cst_45 : f32 to vector<2x128xf32>
    %239 = arith.addf %238, %237 : vector<2x128xf32>
    %240 = arith.divf %238, %239 : vector<2x128xf32>
    %241 = math.tanh %235 : vector<2x128xf32>
    %242 = vector.extract_strided_slice %240 {offsets = [0, 0], sizes = [2, 32], strides = [1, 1]} : vector<2x128xf32> to vector<2x32xf32>
    %243 = vector.extract_strided_slice %240 {offsets = [0, 32], sizes = [2, 32], strides = [1, 1]} : vector<2x128xf32> to vector<2x32xf32>
    %244 = vector.extract_strided_slice %241 {offsets = [0, 64], sizes = [2, 32], strides = [1, 1]} : vector<2x128xf32> to vector<2x32xf32>
    %245 = vector.extract_strided_slice %240 {offsets = [0, 96], sizes = [2, 32], strides = [1, 1]} : vector<2x128xf32> to vector<2x32xf32>
    %246 = arith.mulf %243, %209 : vector<2x32xf32>
    %247 = arith.mulf %242, %244 : vector<2x32xf32>
    %248 = arith.addf %246, %247 : vector<2x32xf32>
    %249 = math.tanh %248 : vector<2x32xf32>
    %250 = arith.mulf %245, %249 : vector<2x32xf32>
    %251 = arith.truncf %250 : vector<2x32xf32> to vector<2x32xbf16>
    %cst_46 = arith.constant dense<0.000000e+00> : vector<2x144xf32>
    %252 = tpu.matmul %251, %3, %cst_46 {dimension_numbers = #tpu.dot_dimension_numbers<[1], [0], [0], [1], [0, 0, 1, 1], [], []>} : vector<2x32xbf16>, vector<32x144xbf16>, vector<2x144xf32> -> vector<2x144xf32>
    %253 = vector.extract_strided_slice %252 {offsets = [0, 0], sizes = [2, 128], strides = [1, 1]} : vector<2x144xf32> to vector<2x128xf32>
    %254 = vector.extract_strided_slice %252 {offsets = [0, 128], sizes = [2, 16], strides = [1, 1]} : vector<2x144xf32> to vector<2x16xf32>
    %255 = arith.addf %254, %6 : vector<2x16xf32>
    %c1 = arith.constant 1 : index
    %c0_47 = arith.constant 0 : index
    %c0_48 = arith.constant 0 : index
    %256 = vector.load %arg9[%c1, %c0_47, %c0_48] : memref<5x2x16xf32, #tpu.memory_space<vmem>>, vector<1x2x16xf32>
    %257 = vector.shape_cast %256 : vector<1x2x16xf32> to vector<2x16xf32>
    %258 = vector.shape_cast %255 : vector<2x16xf32> to vector<1x2x16xf32>
    tpu.vector_store %arg9[%c1, %c0_47, %c0_48], %258 {strides = array<i32>} : memref<5x2x16xf32, #tpu.memory_space<vmem>>, vector<1x2x16xf32>,
    %259 = tpu.iota {dimensions = array<i32: 1>} : vector<2x16xi32>
    %cst_49 = arith.constant dense<0xFF800000> : vector<2xf32>
    %260 = vector.multi_reduction <maximumf>, %255, %cst_49 [1] : vector<2x16xf32> to vector<2xf32>
    %261 = vector.shape_cast %260 : vector<2xf32> to vector<2x1xf32>
    %262 = vector.broadcast %261 : vector<2x1xf32> to vector<2x16xf32>
    %263 = arith.cmpf oge, %255, %262 : vector<2x16xf32>
    %c16_i32_50 = arith.constant 16 : i32
    %264 = vector.broadcast %c16_i32_50 : i32 to vector<2x16xi32>
    %265 = arith.select %263, %259, %264 : vector<2x16xi1>, vector<2x16xi32>
    %cst_51 = arith.constant dense<2147483647> : vector<2xi32>
    %266 = vector.multi_reduction <minsi>, %265, %cst_51 [1] : vector<2x16xi32> to vector<2xi32>
    %267 = vector.shape_cast %266 : vector<2xi32> to vector<2x1xi32>
    %268 = vector.broadcast %267 : vector<2x1xi32> to vector<2x16xi32>
    %269 = arith.cmpi eq, %259, %268 : vector<2x16xi32>
    %270 = arith.extui %269 : vector<2x16xi1> to vector<2x16xi32>
    %271 = arith.sitofp %270 : vector<2x16xi32> to vector<2x16xf32>
    %272 = arith.truncf %271 : vector<2x16xf32> to vector<2x16xbf16>
    %cst_52 = arith.constant dense<0.000000e+00> : vector<2x128xf32>
    %273 = tpu.matmul %272, %26, %cst_52 {dimension_numbers = #tpu.dot_dimension_numbers<[1], [0], [0], [1], [0, 0, 1, 1], [], []>} : vector<2x16xbf16>, vector<16x128xbf16>, vector<2x128xf32> -> vector<2x128xf32>
    %274 = arith.addf %253, %273 : vector<2x128xf32>
    %275 = arith.negf %274 : vector<2x128xf32>
    %276 = math.exp %275 : vector<2x128xf32>
    %cst_53 = arith.constant 1.000000e+00 : f32
    %277 = vector.broadcast %cst_53 : f32 to vector<2x128xf32>
    %278 = arith.addf %277, %276 : vector<2x128xf32>
    %279 = arith.divf %277, %278 : vector<2x128xf32>
    %280 = math.tanh %274 : vector<2x128xf32>
    %281 = vector.extract_strided_slice %279 {offsets = [0, 0], sizes = [2, 32], strides = [1, 1]} : vector<2x128xf32> to vector<2x32xf32>
    %282 = vector.extract_strided_slice %279 {offsets = [0, 32], sizes = [2, 32], strides = [1, 1]} : vector<2x128xf32> to vector<2x32xf32>
    %283 = vector.extract_strided_slice %280 {offsets = [0, 64], sizes = [2, 32], strides = [1, 1]} : vector<2x128xf32> to vector<2x32xf32>
    %284 = vector.extract_strided_slice %279 {offsets = [0, 96], sizes = [2, 32], strides = [1, 1]} : vector<2x128xf32> to vector<2x32xf32>
    %285 = arith.mulf %282, %248 : vector<2x32xf32>
    %286 = arith.mulf %281, %283 : vector<2x32xf32>
    %287 = arith.addf %285, %286 : vector<2x32xf32>
    %288 = math.tanh %287 : vector<2x32xf32>
    %289 = arith.mulf %284, %288 : vector<2x32xf32>
    %290 = arith.truncf %289 : vector<2x32xf32> to vector<2x32xbf16>
    %cst_54 = arith.constant dense<0.000000e+00> : vector<2x144xf32>
    %291 = tpu.matmul %290, %3, %cst_54 {dimension_numbers = #tpu.dot_dimension_numbers<[1], [0], [0], [1], [0, 0, 1, 1], [], []>} : vector<2x32xbf16>, vector<32x144xbf16>, vector<2x144xf32> -> vector<2x144xf32>
    %292 = vector.extract_strided_slice %291 {offsets = [0, 0], sizes = [2, 128], strides = [1, 1]} : vector<2x144xf32> to vector<2x128xf32>
    %293 = vector.extract_strided_slice %291 {offsets = [0, 128], sizes = [2, 16], strides = [1, 1]} : vector<2x144xf32> to vector<2x16xf32>
    %294 = arith.addf %293, %6 : vector<2x16xf32>
    %c2 = arith.constant 2 : index
    %c0_55 = arith.constant 0 : index
    %c0_56 = arith.constant 0 : index
    %295 = vector.load %arg9[%c2, %c0_55, %c0_56] : memref<5x2x16xf32, #tpu.memory_space<vmem>>, vector<1x2x16xf32>
    %296 = vector.shape_cast %295 : vector<1x2x16xf32> to vector<2x16xf32>
    %297 = vector.shape_cast %294 : vector<2x16xf32> to vector<1x2x16xf32>
    tpu.vector_store %arg9[%c2, %c0_55, %c0_56], %297 {strides = array<i32>} : memref<5x2x16xf32, #tpu.memory_space<vmem>>, vector<1x2x16xf32>,
    %298 = tpu.iota {dimensions = array<i32: 1>} : vector<2x16xi32>
    %cst_57 = arith.constant dense<0xFF800000> : vector<2xf32>
    %299 = vector.multi_reduction <maximumf>, %294, %cst_57 [1] : vector<2x16xf32> to vector<2xf32>
    %300 = vector.shape_cast %299 : vector<2xf32> to vector<2x1xf32>
    %301 = vector.broadcast %300 : vector<2x1xf32> to vector<2x16xf32>
    %302 = arith.cmpf oge, %294, %301 : vector<2x16xf32>
    %c16_i32_58 = arith.constant 16 : i32
    %303 = vector.broadcast %c16_i32_58 : i32 to vector<2x16xi32>
    %304 = arith.select %302, %298, %303 : vector<2x16xi1>, vector<2x16xi32>
    %cst_59 = arith.constant dense<2147483647> : vector<2xi32>
    %305 = vector.multi_reduction <minsi>, %304, %cst_59 [1] : vector<2x16xi32> to vector<2xi32>
    %306 = vector.shape_cast %305 : vector<2xi32> to vector<2x1xi32>
    %307 = vector.broadcast %306 : vector<2x1xi32> to vector<2x16xi32>
    %308 = arith.cmpi eq, %298, %307 : vector<2x16xi32>
    %309 = arith.extui %308 : vector<2x16xi1> to vector<2x16xi32>
    %310 = arith.sitofp %309 : vector<2x16xi32> to vector<2x16xf32>
    %311 = arith.truncf %310 : vector<2x16xf32> to vector<2x16xbf16>
    %cst_60 = arith.constant dense<0.000000e+00> : vector<2x128xf32>
    %312 = tpu.matmul %311, %26, %cst_60 {dimension_numbers = #tpu.dot_dimension_numbers<[1], [0], [0], [1], [0, 0, 1, 1], [], []>} : vector<2x16xbf16>, vector<16x128xbf16>, vector<2x128xf32> -> vector<2x128xf32>
    %313 = arith.addf %292, %312 : vector<2x128xf32>
    %314 = arith.negf %313 : vector<2x128xf32>
    %315 = math.exp %314 : vector<2x128xf32>
    %cst_61 = arith.constant 1.000000e+00 : f32
    %316 = vector.broadcast %cst_61 : f32 to vector<2x128xf32>
    %317 = arith.addf %316, %315 : vector<2x128xf32>
    %318 = arith.divf %316, %317 : vector<2x128xf32>
    %319 = math.tanh %313 : vector<2x128xf32>
    %320 = vector.extract_strided_slice %318 {offsets = [0, 0], sizes = [2, 32], strides = [1, 1]} : vector<2x128xf32> to vector<2x32xf32>
    %321 = vector.extract_strided_slice %318 {offsets = [0, 32], sizes = [2, 32], strides = [1, 1]} : vector<2x128xf32> to vector<2x32xf32>
    %322 = vector.extract_strided_slice %319 {offsets = [0, 64], sizes = [2, 32], strides = [1, 1]} : vector<2x128xf32> to vector<2x32xf32>
    %323 = vector.extract_strided_slice %318 {offsets = [0, 96], sizes = [2, 32], strides = [1, 1]} : vector<2x128xf32> to vector<2x32xf32>
    %324 = arith.mulf %321, %287 : vector<2x32xf32>
    %325 = arith.mulf %320, %322 : vector<2x32xf32>
    %326 = arith.addf %324, %325 : vector<2x32xf32>
    %327 = math.tanh %326 : vector<2x32xf32>
    %328 = arith.mulf %323, %327 : vector<2x32xf32>
    %329 = arith.truncf %328 : vector<2x32xf32> to vector<2x32xbf16>
    %cst_62 = arith.constant dense<0.000000e+00> : vector<2x144xf32>
    %330 = tpu.matmul %329, %3, %cst_62 {dimension_numbers = #tpu.dot_dimension_numbers<[1], [0], [0], [1], [0, 0, 1, 1], [], []>} : vector<2x32xbf16>, vector<32x144xbf16>, vector<2x144xf32> -> vector<2x144xf32>
    %331 = vector.extract_strided_slice %330 {offsets = [0, 0], sizes = [2, 128], strides = [1, 1]} : vector<2x144xf32> to vector<2x128xf32>
    %332 = vector.extract_strided_slice %330 {offsets = [0, 128], sizes = [2, 16], strides = [1, 1]} : vector<2x144xf32> to vector<2x16xf32>
    %333 = arith.addf %332, %6 : vector<2x16xf32>
    %c3 = arith.constant 3 : index
    %c0_63 = arith.constant 0 : index
    %c0_64 = arith.constant 0 : index
    %334 = vector.load %arg9[%c3, %c0_63, %c0_64] : memref<5x2x16xf32, #tpu.memory_space<vmem>>, vector<1x2x16xf32>
    %335 = vector.shape_cast %334 : vector<1x2x16xf32> to vector<2x16xf32>
    %336 = vector.shape_cast %333 : vector<2x16xf32> to vector<1x2x16xf32>
    tpu.vector_store %arg9[%c3, %c0_63, %c0_64], %336 {strides = array<i32>} : memref<5x2x16xf32, #tpu.memory_space<vmem>>, vector<1x2x16xf32>,
    %337 = tpu.iota {dimensions = array<i32: 1>} : vector<2x16xi32>
    %cst_65 = arith.constant dense<0xFF800000> : vector<2xf32>
    %338 = vector.multi_reduction <maximumf>, %333, %cst_65 [1] : vector<2x16xf32> to vector<2xf32>
    %339 = vector.shape_cast %338 : vector<2xf32> to vector<2x1xf32>
    %340 = vector.broadcast %339 : vector<2x1xf32> to vector<2x16xf32>
    %341 = arith.cmpf oge, %333, %340 : vector<2x16xf32>
    %c16_i32_66 = arith.constant 16 : i32
    %342 = vector.broadcast %c16_i32_66 : i32 to vector<2x16xi32>
    %343 = arith.select %341, %337, %342 : vector<2x16xi1>, vector<2x16xi32>
    %cst_67 = arith.constant dense<2147483647> : vector<2xi32>
    %344 = vector.multi_reduction <minsi>, %343, %cst_67 [1] : vector<2x16xi32> to vector<2xi32>
    %345 = vector.shape_cast %344 : vector<2xi32> to vector<2x1xi32>
    %346 = vector.broadcast %345 : vector<2x1xi32> to vector<2x16xi32>
    %347 = arith.cmpi eq, %337, %346 : vector<2x16xi32>
    %348 = arith.extui %347 : vector<2x16xi1> to vector<2x16xi32>
    %349 = arith.sitofp %348 : vector<2x16xi32> to vector<2x16xf32>
    %350 = arith.truncf %349 : vector<2x16xf32> to vector<2x16xbf16>
    %cst_68 = arith.constant dense<0.000000e+00> : vector<2x128xf32>
    %351 = tpu.matmul %350, %26, %cst_68 {dimension_numbers = #tpu.dot_dimension_numbers<[1], [0], [0], [1], [0, 0, 1, 1], [], []>} : vector<2x16xbf16>, vector<16x128xbf16>, vector<2x128xf32> -> vector<2x128xf32>
    %352 = arith.addf %331, %351 : vector<2x128xf32>
    %353 = arith.negf %352 : vector<2x128xf32>
    %354 = math.exp %353 : vector<2x128xf32>
    %cst_69 = arith.constant 1.000000e+00 : f32
    %355 = vector.broadcast %cst_69 : f32 to vector<2x128xf32>
    %356 = arith.addf %355, %354 : vector<2x128xf32>
    %357 = arith.divf %355, %356 : vector<2x128xf32>
    %358 = math.tanh %352 : vector<2x128xf32>
    %359 = vector.extract_strided_slice %357 {offsets = [0, 0], sizes = [2, 32], strides = [1, 1]} : vector<2x128xf32> to vector<2x32xf32>
    %360 = vector.extract_strided_slice %357 {offsets = [0, 32], sizes = [2, 32], strides = [1, 1]} : vector<2x128xf32> to vector<2x32xf32>
    %361 = vector.extract_strided_slice %358 {offsets = [0, 64], sizes = [2, 32], strides = [1, 1]} : vector<2x128xf32> to vector<2x32xf32>
    %362 = vector.extract_strided_slice %357 {offsets = [0, 96], sizes = [2, 32], strides = [1, 1]} : vector<2x128xf32> to vector<2x32xf32>
    %363 = arith.mulf %360, %326 : vector<2x32xf32>
    %364 = arith.mulf %359, %361 : vector<2x32xf32>
    %365 = arith.addf %363, %364 : vector<2x32xf32>
    %366 = math.tanh %365 : vector<2x32xf32>
    %367 = arith.mulf %362, %366 : vector<2x32xf32>
    %368 = arith.truncf %367 : vector<2x32xf32> to vector<2x32xbf16>
    %cst_70 = arith.constant dense<0.000000e+00> : vector<2x144xf32>
    %369 = tpu.matmul %368, %3, %cst_70 {dimension_numbers = #tpu.dot_dimension_numbers<[1], [0], [0], [1], [0, 0, 1, 1], [], []>} : vector<2x32xbf16>, vector<32x144xbf16>, vector<2x144xf32> -> vector<2x144xf32>
    %370 = vector.extract_strided_slice %369 {offsets = [0, 128], sizes = [2, 16], strides = [1, 1]} : vector<2x144xf32> to vector<2x16xf32>
    %371 = arith.addf %370, %6 : vector<2x16xf32>
    %c4 = arith.constant 4 : index
    %c0_71 = arith.constant 0 : index
    %c0_72 = arith.constant 0 : index
    %372 = vector.load %arg9[%c4, %c0_71, %c0_72] : memref<5x2x16xf32, #tpu.memory_space<vmem>>, vector<1x2x16xf32>
    %373 = vector.shape_cast %372 : vector<1x2x16xf32> to vector<2x16xf32>
    %374 = vector.shape_cast %371 : vector<2x16xf32> to vector<1x2x16xf32>
    tpu.vector_store %arg9[%c4, %c0_71, %c0_72], %374 {strides = array<i32>} : memref<5x2x16xf32, #tpu.memory_space<vmem>>, vector<1x2x16xf32>,
    return
  }
}

</mosaic_0001>

<llo_original>
// kernel: tpu_custom_call.1
$region0: #{tpu_custom_call.1}
  #allocation0 [shape = 'u32[]', space=smem, size = 0x4, offset = 0x4, fixed_abs, tag = 'smem constant byte address 0x4 - core index']
  #allocation1 [shape = 'u32[144,128]{1,0:T(1,128)}', space=vmem, size = 0x12000, scoped, tag = 'internal scratch']
  %s0 = inlined_call_operand.vmem [shape: f32[16,4], index: 0, kind: input, shape index: {}]
  %s1 = inlined_call_operand.hbm [shape: f32[4,128], index: 1, kind: input, shape index: {}]
  %s2 = inlined_call_operand.vmem [shape: f32[32,128], index: 2, kind: input, shape index: {}]
  %s3 = inlined_call_operand.vmem [shape: f32[1,128], index: 3, kind: input, shape index: {}]
  %s4 = inlined_call_operand.vmem [shape: f32[16,8], index: 4, kind: input, shape index: {}]
  %s5 = inlined_call_operand.vmem [shape: f32[8,128], index: 5, kind: input, shape index: {}]
  %s6 = inlined_call_operand.hbm [shape: f32[32,144], index: 6, kind: input, shape index: {}]
  %s7 = inlined_call_operand.vmem [shape: f32[1,128], index: 7, kind: input, shape index: {}]
  %s8 = inlined_call_operand.vmem [shape: f32[1,16], index: 8, kind: input, shape index: {}]
  %s9 = inlined_call_operand.hbm [shape: f32[5,2,16], index: 9, kind: output, shape index: {}]
  %s10 = sld [smem:[#allocation0]]
  $region54: #{tpu_custom_call.1} parent=0
    _
  %s12 = ssub.s32 1, %s10
  %s13 = scalar_select 0, %s12, %s10
  $region1: #{tpu_custom_call.1} parent=0
    #allocation2 [shape = 'u8[2048]{0}', space=vmem, size = 0x800, scoped, tag = 'input window, operand 1, single buffered']
    #allocation3 [shape = 's32[1]{0}', space=sflag, size = 0x4, scoped, tag = 'scoped memory for tpu_custom_call.1']
    #allocation4 [shape = 's32[1]{0}', space=sflag, size = 0x4, scoped, tag = 'scoped memory for tpu_custom_call.1']
    #allocation5 [shape = 'u8[32768]{0}', space=vmem, size = 0x8000, scoped, tag = 'input window, operand 6, single buffered']
    #allocation6 [shape = 's32[1]{0}', space=sflag, size = 0x4, scoped, tag = 'scoped memory for tpu_custom_call.1']
    #allocation7 [shape = 'u8[5120]{0}', space=vmem, size = 0x1400, scoped, tag = 'output window, operand 0, single buffered']
    %14 = vsyncpa [#allocation3], 0
    %15 = vsyncpa [#allocation6], 0
    %16 = vsyncpa [#allocation4], 0
    // Predicated region
    $region2: #{tpu_custom_call.1} parent=1 // pred_check
      _
    $region3: #{tpu_custom_call.1} parent=1 // pred_check_branch
      %18 = sbr.rel (0) target = $region5
    $region4: #{tpu_custom_call.1} parent=1 // pred_region
      _
    $region5: #{tpu_custom_call.1} parent=1 // pred_fallthru
      _
    // Predicated region
    $region6: #{tpu_custom_call.1} parent=1 // pred_check
      _
    $region7: #{tpu_custom_call.1} parent=1 // pred_check_branch
      %20 = sbr.rel (0) target = $region9
    $region8: #{tpu_custom_call.1} parent=1 // pred_region
      %s22 = ssub.s32 64, 64
      %23 = vsyncadd [#allocation3], %s22
      %s25 = sshll.u32 [#allocation2], 4
      %s26 = int_to_ptr.vmem [resolvable:$true] %s25
      %28 = dma.hbm_to_vmem [thread:$0]  %s1, 64, %s26, [#allocation3]
    $region9: #{tpu_custom_call.1} parent=1 // pred_fallthru
      _
    // Predicated region
    $region10: #{tpu_custom_call.1} parent=1 // pred_check
      _
    $region11: #{tpu_custom_call.1} parent=1 // pred_check_branch
      %30 = sbr.rel (0) target = $region13
    $region12: #{tpu_custom_call.1} parent=1 // pred_region
      _
    $region13: #{tpu_custom_call.1} parent=1 // pred_fallthru
      _
    // Predicated region
    $region14: #{tpu_custom_call.1} parent=1 // pred_check
      _
    $region15: #{tpu_custom_call.1} parent=1 // pred_check_branch
      %32 = sbr.rel (0) target = $region17
    $region16: #{tpu_custom_call.1} parent=1 // pred_region
      _
    $region17: #{tpu_custom_call.1} parent=1 // pred_fallthru
      _
    // Predicated region
    $region18: #{tpu_custom_call.1} parent=1 // pred_check
      _
    $region19: #{tpu_custom_call.1} parent=1 // pred_check_branch
      %34 = sbr.rel (0) target = $region21
    $region20: #{tpu_custom_call.1} parent=1 // pred_region
      _
    $region21: #{tpu_custom_call.1} parent=1 // pred_fallthru
      _
    // Predicated region
    $region22: #{tpu_custom_call.1} parent=1 // pred_check
      _
    $region23: #{tpu_custom_call.1} parent=1 // pred_check_branch
      %36 = sbr.rel (0) target = $region25
    $region24: #{tpu_custom_call.1} parent=1 // pred_region
      _
    $region25: #{tpu_custom_call.1} parent=1 // pred_fallthru
      _
    // Predicated region
    $region26: #{tpu_custom_call.1} parent=1 // pred_check
      _
    $region27: #{tpu_custom_call.1} parent=1 // pred_check_branch
      %38 = sbr.rel (0) target = $region29
    $region28: #{tpu_custom_call.1} parent=1 // pred_region
      %s40 = ssub.s32 1024, 1024
      %41 = vsyncadd [#allocation6], %s40
      %s42 = sshll.u32 [#allocation5], 4
      %s43 = int_to_ptr.vmem [resolvable:$true] %s42
      %48 = dma.hbm_to_vmem [thread:$0]  %s6, 1024, %s43, [#allocation6], 256, 256, 16
    $region29: #{tpu_custom_call.1} parent=1 // pred_fallthru
      _
    // Predicated region
    $region30: #{tpu_custom_call.1} parent=1 // pred_check
      _
    $region31: #{tpu_custom_call.1} parent=1 // pred_check_branch
      %50 = sbr.rel (0) target = $region33
    $region32: #{tpu_custom_call.1} parent=1 // pred_region
      _
    $region33: #{tpu_custom_call.1} parent=1 // pred_fallthru
      _
    // Predicated region
    $region34: #{tpu_custom_call.1} parent=1 // pred_check
      _
    $region35: #{tpu_custom_call.1} parent=1 // pred_check_branch
      %52 = sbr.rel (0) target = $region37
    $region36: #{tpu_custom_call.1} parent=1 // pred_region
      _
    $region37: #{tpu_custom_call.1} parent=1 // pred_fallthru
      _
    // Predicated region
    $region38: #{tpu_custom_call.1} parent=1 // pred_check
      _
    $region39: #{tpu_custom_call.1} parent=1 // pred_check_branch
      %54 = sbr.rel (0) target = $region41
    $region40: #{tpu_custom_call.1} parent=1 // pred_region
      %55 = dma.done [#allocation3], 64
    $region41: #{tpu_custom_call.1} parent=1 // pred_fallthru
      _
    // Predicated region
    $region42: #{tpu_custom_call.1} parent=1 // pred_check
      _
    $region43: #{tpu_custom_call.1} parent=1 // pred_check_branch
      %57 = sbr.rel (0) target = $region45
    $region44: #{tpu_custom_call.1} parent=1 // pred_region
      %58 = dma.done [#allocation6], 1024
    $region45: #{tpu_custom_call.1} parent=1 // pred_fallthru
      _
    %v60 = vld [vmem:[%s2] sm:$0xff]
    %v61 = vld [vmem:[%s2 + $0x8] sm:$0xff]
    %v62 = vld [vmem:[%s2 + $0x10] sm:$0xff]
    %v63 = vld [vmem:[%s2 + $0x18] sm:$0xff]
    %v64 = vpack.c.bf16 %v61, %v60
    %v65 = vpack.c.bf16 %v63, %v62
    %v66 = vld [vmem:[#allocation5] sm:$0xff]
    %v67 = vld [vmem:[#allocation5 + $0x8] sm:$0xff]
    %v68 = vld [vmem:[#allocation5 + $0x10] sm:$0xff]
    %v69 = vld [vmem:[#allocation5 + $0x18] sm:$0xff]
    %v70 = vld [vmem:[#allocation5 + $0x20] sm:$0xff]
    %v71 = vld [vmem:[#allocation5 + $0x28] sm:$0xff]
    %v72 = vld [vmem:[#allocation5 + $0x30] sm:$0xff]
    %v73 = vld [vmem:[#allocation5 + $0x38] sm:$0xff]
    %v74 = vpack.c.bf16 %v68, %v66
    %v75 = vpack.c.bf16 %v69, %v67
    %v76 = vpack.c.bf16 %v72, %v70
    %v77 = vpack.c.bf16 %v73, %v71
    %v78 = vld [vmem:[%s8] sm:$0x1]
    %v80 = vlaneseq
    %v81 = vshrl.u32 %v80, 7
    %v82 = vsub.s32 0, %v81
    %v83 = vrot.slane %v78, %v82
    %v85 = vld [vmem:[%s0] sm:$0xff]
    %v86 = vld [vmem:[%s0 + $0x8] sm:$0xff]
    %v87 = vpack.c.bf16 %v86, %v85
    %v88 = vld [vmem:[#allocation2] sm:$0xf]
    %v89 = vpack.c.bf16 %v88, %v88
    %v90 = vld [vmem:[%s3] sm:$0x1]
    %v92 = vlaneseq
    %v93 = vshrl.u32 %v92, 7
    %v94 = vsub.s32 0, %v93
    %v95 = vrot.slane %v90, %v94
    %vm97 = vcmask 31744
    %v99 = vsel %vm97, %v87, 0
    %vm101 = vcmask 1041408
    %v103 = vsel %vm101, %v89, 0
    %105 = vmatprep.subr.bf16.mxu0 0
    %106 = vmatpush1.bf16.msra.mxu0 0
    %107 = vmatprep.subr.bf16.mxu0 0
    %108 = vmatpush1.bf16.msra.mxu0 0
    %109 = vmatprep.subr.bf16.mxu0 0
    %110 = vmatpush1.bf16.msra.mxu0 0
    %111 = vmatprep.subr.bf16.mxu0 0
    %112 = vmatpush1.bf16.msra.mxu0 0
    %113 = vmatprep.subr.bf16.mxu0 0
    %114 = vmatpush1.bf16.msra.mxu0 0
    %115 = vmatprep.subr.bf16.mxu0 0
    %116 = vmatpush1.bf16.msra.mxu0 0
    %117 = vmatprep.subr.bf16.mxu0 0
    %118 = vmatpush1.bf16.msra.mxu0 0
    %119 = vmatprep.subr.bf16.mxu0 0
    %120 = vmatpush1.bf16.msra.mxu0 %v103
    %121 = vmatprep.subr.bf16.mxu0 0
    %122 = vmatpush2.bf16.msra.mxu0 0
    %123 = vmatprep.subr.bf16.mxu0 0
    %124 = vmatpush2.bf16.msra.mxu0 0
    %125 = vmatprep.subr.bf16.mxu0 0
    %126 = vmatpush2.bf16.msra.mxu0 0
    %127 = vmatprep.subr.bf16.mxu0 0
    %128 = vmatpush2.bf16.msra.mxu0 0
    %129 = vmatprep.subr.bf16.mxu0 0
    %130 = vmatpush2.bf16.msra.mxu0 0
    %131 = vmatprep.subr.bf16.mxu0 0
    %132 = vmatpush2.bf16.msra.mxu0 0
    %133 = vmatprep.subr.bf16.mxu0 0
    %134 = vmatpush2.bf16.msra.mxu0 0
    %135 = vmatprep.subr.bf16.mxu0 0
    %136 = vmatpush2.bf16.msra.mxu0 0
    %137 = vmatprep.mubr.bf16.mxu0 0
    %138 = vmatmul.mubr.bf16.gmra.mxu0 %v99
    %v139 = vpop.f32.mrf.mxu0
    %v140 = vadd.f32 %v95, %v139
    %v141 = vpop.f32.mrf.mxu0
    %v142 = vpop.f32.mrf.mxu0
    %v143 = vadd.f32 %v95, %v142
    %v144 = vpop.f32.mrf.mxu0
    %145 = vdwg.mxu0
    %v148 = vcombine.high %v140, %v140
    %v150 = vunpack.c.l.s4 1983009808
    %v151 = vunpack.c.0.s8 %v150
    %v152 = vlaneseq
    %v153 = vshrl.u32 %v152, 7
    %v154 = vsub.s32 %v151, %v153
    %v155 = vrot.slane %v140, %v154
    %v157 = vunpack.c.l.s4 1983009808
    %v158 = vunpack.c.0.s8 %v157
    %v159 = vlaneseq
    %v160 = vshrl.u32 %v159, 7
    %v161 = vsub.s32 %v158, %v160
    %v162 = vrot.slane %v148, %v161
    %v163 = vcombine.high %v155, %v155
    %v164 = vcombine.high %v162, %v162
    %v165 = vcombine.high %v143, %v143
    %v167 = vunpack.c.l.s4 1983009808
    %v168 = vunpack.c.0.s8 %v167
    %v169 = vlaneseq
    %v170 = vshrl.u32 %v169, 7
    %v171 = vsub.s32 %v168, %v170
    %v172 = vrot.slane %v143, %v171
    %v174 = vunpack.c.l.s4 1983009808
    %v175 = vunpack.c.0.s8 %v174
    %v176 = vlaneseq
    %v177 = vshrl.u32 %v176, 7
    %v178 = vsub.s32 %v175, %v177
    %v179 = vrot.slane %v165, %v178
    %v180 = vcombine.high %v172, %v172
    %v181 = vcombine.high %v179, %v179
    %v190 = vld [vmem:[%s4] sm:$0xff]
    %v191 = vld [vmem:[%s4 + $0x8] sm:$0xff]
    %v192 = vpack.c.bf16 %v191, %v190
    %v193 = vld [vmem:[%s5] sm:$0xff]
    %v194 = vpack.c.bf16 %v193, %v193
    %v195 = vld [vmem:[%s7] sm:$0x1]
    %v197 = vlaneseq
    %v198 = vshrl.u32 %v197, 7
    %v199 = vsub.s32 0, %v198
    %v200 = vrot.slane %v195, %v199
    %vm202 = vcmask 64512
    %v204 = vsel %vm202, %v192, 0
    %vm206 = vcmask 1043456
    %v208 = vsel %vm206, %v194, 0
    %210 = vmatprep.subr.bf16.mxu0 0
    %211 = vmatpush1.bf16.msra.mxu0 0
    %212 = vmatprep.subr.bf16.mxu0 0
    %213 = vmatpush1.bf16.msra.mxu0 0
    %214 = vmatprep.subr.bf16.mxu0 0
    %215 = vmatpush1.bf16.msra.mxu0 0
    %216 = vmatprep.subr.bf16.mxu0 0
    %217 = vmatpush1.bf16.msra.mxu0 0
    %218 = vmatprep.subr.bf16.mxu0 0
    %219 = vmatpush1.bf16.msra.mxu0 0
    %220 = vmatprep.subr.bf16.mxu0 0
    %221 = vmatpush1.bf16.msra.mxu0 0
    %222 = vmatprep.subr.bf16.mxu0 0
    %223 = vmatpush1.bf16.msra.mxu0 0
    %224 = vmatprep.subr.bf16.mxu0 0
    %225 = vmatpush1.bf16.msra.mxu0 %v208
    %226 = vmatprep.subr.bf16.mxu0 0
    %227 = vmatpush2.bf16.msra.mxu0 0
    %228 = vmatprep.subr.bf16.mxu0 0
    %229 = vmatpush2.bf16.msra.mxu0 0
    %230 = vmatprep.subr.bf16.mxu0 0
    %231 = vmatpush2.bf16.msra.mxu0 0
    %232 = vmatprep.subr.bf16.mxu0 0
    %233 = vmatpush2.bf16.msra.mxu0 0
    %234 = vmatprep.subr.bf16.mxu0 0
    %235 = vmatpush2.bf16.msra.mxu0 0
    %236 = vmatprep.subr.bf16.mxu0 0
    %237 = vmatpush2.bf16.msra.mxu0 0
    %238 = vmatprep.subr.bf16.mxu0 0
    %239 = vmatpush2.bf16.msra.mxu0 0
    %240 = vmatprep.subr.bf16.mxu0 0
    %241 = vmatpush2.bf16.msra.mxu0 0
    %242 = vmatprep.mubr.bf16.mxu0 0
    %243 = vmatmul.mubr.bf16.gmra.mxu0 %v204
    %v244 = vpop.f32.mrf.mxu0
    %v245 = vadd.f32 %v200, %v244
    %v246 = vpop.f32.mrf.mxu0
    %v247 = vpop.f32.mrf.mxu0
    %v248 = vadd.f32 %v200, %v247
    %v249 = vpop.f32.mrf.mxu0
    %250 = vdwg.mxu0
    %v251 = vpack.c.bf16 %v248, %v245
    %vm252 = vcmask 261120
    %v254 = vsel %vm252, 0, 0
    %256 = vmatprep.subr.bf16.mxu0 0
    %257 = vmatpush1.bf16.msra.mxu0 0
    %258 = vmatprep.subr.bf16.mxu0 0
    %259 = vmatpush1.bf16.msra.mxu0 0
    %260 = vmatprep.subr.bf16.mxu0 0
    %261 = vmatpush1.bf16.msra.mxu0 0
    %262 = vmatprep.subr.bf16.mxu0 0
    %263 = vmatpush1.bf16.msra.mxu0 0
    %264 = vmatprep.subr.bf16.mxu0 0
    %265 = vmatpush1.bf16.msra.mxu0 0
    %266 = vmatprep.subr.bf16.mxu0 0
    %267 = vmatpush1.bf16.msra.mxu0 0
    %268 = vmatprep.subr.bf16.mxu0 0
    %269 = vmatpush1.bf16.msra.mxu0 %v65
    %270 = vmatprep.subr.bf16.mxu0 0
    %271 = vmatpush1.bf16.msra.mxu0 %v64
    %272 = vmatprep.subr.bf16.mxu0 0
    %273 = vmatpush2.bf16.msra.mxu0 0
    %274 = vmatprep.subr.bf16.mxu0 0
    %275 = vmatpush2.bf16.msra.mxu0 0
    %276 = vmatprep.subr.bf16.mxu0 0
    %277 = vmatpush2.bf16.msra.mxu0 0
    %278 = vmatprep.subr.bf16.mxu0 0
    %279 = vmatpush2.bf16.msra.mxu0 0
    %280 = vmatprep.subr.bf16.mxu0 0
    %281 = vmatpush2.bf16.msra.mxu0 0
    %282 = vmatprep.subr.bf16.mxu0 0
    %283 = vmatpush2.bf16.msra.mxu0 0
    %284 = vmatprep.subr.bf16.mxu0 0
    %285 = vmatpush2.bf16.msra.mxu0 0
    %286 = vmatprep.subr.bf16.mxu0 0
    %287 = vmatpush2.bf16.msra.mxu0 0
    %288 = vmatprep.mubr.bf16.mxu0 0
    %289 = vmatmul.mubr.bf16.gmra.mxu0 %v254
    %v290 = vpop.f32.mrf.mxu0
    %v291 = vadd.f32 %v155, %v290
    %v292 = vpop.f32.mrf.mxu0
    %v293 = vpop.f32.mrf.mxu0
    %v294 = vpop.f32.mrf.mxu0
    %295 = vdwg.mxu0
    %v296 = vxor.u32 %v291, 2147483648
    %v297 = vmul.f32 %v296, 1.442695
    %v298 = vpow.pop %v297
    %v299 = vadd.f32 %v298, 1.0
    %v300 = vrcp.pop %v299
    %v301 = vmul.f32 1.0, %v300
    %v302 = vtanh.pop %v291
    %v303 = vmul.f32 %v301, 0.0
    %305 = vrot.lane.b32.xlu0 %v302, 64
    %v306 = vpop.permute.xlu0 %305
    %v308 = vmul.f32 %v301, %v306
    %310 = vrot.lane.b32.xlu0 %v308, 32
    %v311 = vpop.permute.xlu0 %310
    %v313 = vadd.f32 %v303, %v311
    %v314 = vtanh.pop %v313
    %316 = vrot.lane.b32.xlu0 %v314, 64
    %v317 = vpop.permute.xlu0 %316
    %v319 = vmul.f32 %v301, %v317
    %v320 = vpack.c.bf16 %v319, %v319
    %322 = vrot.lane.b32.xlu0 %v320, 32
    %v323 = vpop.permute.xlu0 %322
    %v325 = vsel %vm252, %v323, 0
    %327 = vmatprep.subr.bf16.mxu0 0
    %328 = vmatpush1.bf16.msra.mxu0 0
    %329 = vmatprep.subr.bf16.mxu0 0
    %330 = vmatpush1.bf16.msra.mxu0 0
    %331 = vmatprep.subr.bf16.mxu0 0
    %332 = vmatpush1.bf16.msra.mxu0 0
    %333 = vmatprep.subr.bf16.mxu0 0
    %334 = vmatpush1.bf16.msra.mxu0 0
    %335 = vmatprep.subr.bf16.mxu0 0
    %336 = vmatpush1.bf16.msra.mxu0 0
    %337 = vmatprep.subr.bf16.mxu0 0
    %338 = vmatpush1.bf16.msra.mxu0 0
    %339 = vmatprep.subr.bf16.mxu0 0
    %340 = vmatpush1.bf16.msra.mxu0 %v65
    %341 = vmatprep.subr.bf16.mxu0 0
    %342 = vmatpush1.bf16.msra.mxu0 %v64
    %343 = vmatprep.subr.bf16.mxu0 0
    %344 = vmatpush2.bf16.msra.mxu0 0
    %345 = vmatprep.subr.bf16.mxu0 0
    %346 = vmatpush2.bf16.msra.mxu0 0
    %347 = vmatprep.subr.bf16.mxu0 0
    %348 = vmatpush2.bf16.msra.mxu0 0
    %349 = vmatprep.subr.bf16.mxu0 0
    %350 = vmatpush2.bf16.msra.mxu0 0
    %351 = vmatprep.subr.bf16.mxu0 0
    %352 = vmatpush2.bf16.msra.mxu0 0
    %353 = vmatprep.subr.bf16.mxu0 0
    %354 = vmatpush2.bf16.msra.mxu0 0
    %355 = vmatprep.subr.bf16.mxu0 0
    %356 = vmatpush2.bf16.msra.mxu0 0
    %357 = vmatprep.subr.bf16.mxu0 0
    %358 = vmatpush2.bf16.msra.mxu0 0
    %359 = vmatprep.mubr.bf16.mxu0 0
    %360 = vmatmul.mubr.bf16.gmra.mxu0 %v325
    %v361 = vpop.f32.mrf.mxu0
    %v362 = vadd.f32 %v163, %v361
    %v363 = vpop.f32.mrf.mxu0
    %v364 = vpop.f32.mrf.mxu0
    %v365 = vpop.f32.mrf.mxu0
    %366 = vdwg.mxu0
    %v367 = vxor.u32 %v362, 2147483648
    %v368 = vmul.f32 %v367, 1.442695
    %v369 = vpow.pop %v368
    %v370 = vadd.f32 %v369, 1.0
    %v371 = vrcp.pop %v370
    %v372 = vmul.f32 1.0, %v371
    %v373 = vtanh.pop %v362
    %v374 = vmul.f32 %v372, %v313
    %376 = vrot.lane.b32.xlu0 %v373, 64
    %v377 = vpop.permute.xlu0 %376
    %v379 = vmul.f32 %v372, %v377
    %381 = vrot.lane.b32.xlu0 %v379, 32
    %v382 = vpop.permute.xlu0 %381
    %v384 = vadd.f32 %v374, %v382
    %v385 = vtanh.pop %v384
    %387 = vrot.lane.b32.xlu0 %v385, 64
    %v388 = vpop.permute.xlu0 %387
    %v390 = vmul.f32 %v372, %v388
    %v391 = vpack.c.bf16 %v390, %v390
    %393 = vrot.lane.b32.xlu0 %v391, 32
    %v394 = vpop.permute.xlu0 %393
    %v396 = vsel %vm252, %v394, 0
    %398 = vmatprep.subr.bf16.mxu0 0
    %399 = vmatpush1.bf16.msra.mxu0 0
    %400 = vmatprep.subr.bf16.mxu0 0
    %401 = vmatpush1.bf16.msra.mxu0 0
    %402 = vmatprep.subr.bf16.mxu0 0
    %403 = vmatpush1.bf16.msra.mxu0 0
    %404 = vmatprep.subr.bf16.mxu0 0
    %405 = vmatpush1.bf16.msra.mxu0 0
    %406 = vmatprep.subr.bf16.mxu0 0
    %407 = vmatpush1.bf16.msra.mxu0 0
    %408 = vmatprep.subr.bf16.mxu0 0
    %409 = vmatpush1.bf16.msra.mxu0 0
    %410 = vmatprep.subr.bf16.mxu0 0
    %411 = vmatpush1.bf16.msra.mxu0 %v65
    %412 = vmatprep.subr.bf16.mxu0 0
    %413 = vmatpush1.bf16.msra.mxu0 %v64
    %414 = vmatprep.subr.bf16.mxu0 0
    %415 = vmatpush2.bf16.msra.mxu0 0
    %416 = vmatprep.subr.bf16.mxu0 0
    %417 = vmatpush2.bf16.msra.mxu0 0
    %418 = vmatprep.subr.bf16.mxu0 0
    %419 = vmatpush2.bf16.msra.mxu0 0
    %420 = vmatprep.subr.bf16.mxu0 0
    %421 = vmatpush2.bf16.msra.mxu0 0
    %422 = vmatprep.subr.bf16.mxu0 0
    %423 = vmatpush2.bf16.msra.mxu0 0
    %424 = vmatprep.subr.bf16.mxu0 0
    %425 = vmatpush2.bf16.msra.mxu0 0
    %426 = vmatprep.subr.bf16.mxu0 0
    %427 = vmatpush2.bf16.msra.mxu0 0
    %428 = vmatprep.subr.bf16.mxu0 0
    %429 = vmatpush2.bf16.msra.mxu0 0
    %430 = vmatprep.mubr.bf16.mxu0 0
    %431 = vmatmul.mubr.bf16.gmra.mxu0 %v396
    %v432 = vpop.f32.mrf.mxu0
    %v433 = vadd.f32 %v162, %v432
    %v434 = vpop.f32.mrf.mxu0
    %v435 = vpop.f32.mrf.mxu0
    %v436 = vpop.f32.mrf.mxu0
    %437 = vdwg.mxu0
    %v438 = vxor.u32 %v433, 2147483648
    %v439 = vmul.f32 %v438, 1.442695
    %v440 = vpow.pop %v439
    %v441 = vadd.f32 %v440, 1.0
    %v442 = vrcp.pop %v441
    %v443 = vmul.f32 1.0, %v442
    %v444 = vtanh.pop %v433
    %v445 = vmul.f32 %v443, %v384
    %447 = vrot.lane.b32.xlu0 %v444, 64
    %v448 = vpop.permute.xlu0 %447
    %v450 = vmul.f32 %v443, %v448
    %452 = vrot.lane.b32.xlu0 %v450, 32
    %v453 = vpop.permute.xlu0 %452
    %v455 = vadd.f32 %v445, %v453
    %v456 = vtanh.pop %v455
    %458 = vrot.lane.b32.xlu0 %v456, 64
    %v459 = vpop.permute.xlu0 %458
    %v461 = vmul.f32 %v443, %v459
    %v462 = vpack.c.bf16 %v461, %v461
    %464 = vrot.lane.b32.xlu0 %v462, 32
    %v465 = vpop.permute.xlu0 %464
    %v467 = vsel %vm252, %v465, 0
    %469 = vmatprep.subr.bf16.mxu0 0
    %470 = vmatpush1.bf16.msra.mxu0 0
    %471 = vmatprep.subr.bf16.mxu0 0
    %472 = vmatpush1.bf16.msra.mxu0 0
    %473 = vmatprep.subr.bf16.mxu0 0
    %474 = vmatpush1.bf16.msra.mxu0 0
    %475 = vmatprep.subr.bf16.mxu0 0
    %476 = vmatpush1.bf16.msra.mxu0 0
    %477 = vmatprep.subr.bf16.mxu0 0
    %478 = vmatpush1.bf16.msra.mxu0 0
    %479 = vmatprep.subr.bf16.mxu0 0
    %480 = vmatpush1.bf16.msra.mxu0 0
    %481 = vmatprep.subr.bf16.mxu0 0
    %482 = vmatpush1.bf16.msra.mxu0 %v65
    %483 = vmatprep.subr.bf16.mxu0 0
    %484 = vmatpush1.bf16.msra.mxu0 %v64
    %485 = vmatprep.subr.bf16.mxu0 0
    %486 = vmatpush2.bf16.msra.mxu0 0
    %487 = vmatprep.subr.bf16.mxu0 0
    %488 = vmatpush2.bf16.msra.mxu0 0
    %489 = vmatprep.subr.bf16.mxu0 0
    %490 = vmatpush2.bf16.msra.mxu0 0
    %491 = vmatprep.subr.bf16.mxu0 0
    %492 = vmatpush2.bf16.msra.mxu0 0
    %493 = vmatprep.subr.bf16.mxu0 0
    %494 = vmatpush2.bf16.msra.mxu0 0
    %495 = vmatprep.subr.bf16.mxu0 0
    %496 = vmatpush2.bf16.msra.mxu0 0
    %497 = vmatprep.subr.bf16.mxu0 0
    %498 = vmatpush2.bf16.msra.mxu0 0
    %499 = vmatprep.subr.bf16.mxu0 0
    %500 = vmatpush2.bf16.msra.mxu0 0
    %501 = vmatprep.mubr.bf16.mxu0 0
    %502 = vmatmul.mubr.bf16.gmra.mxu0 %v467
    %v503 = vpop.f32.mrf.mxu0
    %v504 = vadd.f32 %v164, %v503
    %v505 = vpop.f32.mrf.mxu0
    %v506 = vpop.f32.mrf.mxu0
    %v507 = vpop.f32.mrf.mxu0
    %508 = vdwg.mxu0
    %v509 = vxor.u32 %v504, 2147483648
    %v510 = vmul.f32 %v509, 1.442695
    %v511 = vpow.pop %v510
    %v512 = vadd.f32 %v511, 1.0
    %v513 = vrcp.pop %v512
    %v514 = vmul.f32 1.0, %v513
    %v515 = vtanh.pop %v504
    %v516 = vmul.f32 %v514, %v455
    %518 = vrot.lane.b32.xlu0 %v515, 64
    %v519 = vpop.permute.xlu0 %518
    %v521 = vmul.f32 %v514, %v519
    %523 = vrot.lane.b32.xlu0 %v521, 32
    %v524 = vpop.permute.xlu0 %523
    %v526 = vadd.f32 %v516, %v524
    %v527 = vtanh.pop %v526
    %529 = vrot.lane.b32.xlu0 %v527, 64
    %v530 = vpop.permute.xlu0 %529
    %v532 = vmul.f32 %v514, %v530
    %v533 = vpack.c.bf16 %v532, %v532
    %535 = vrot.lane.b32.xlu0 %v533, 32
    %v536 = vpop.permute.xlu0 %535
    %v538 = vsel %vm252, %v536, 0
    %540 = vmatprep.subr.bf16.mxu0 0
    %541 = vmatpush1.bf16.msra.mxu0 0
    %542 = vmatprep.subr.bf16.mxu0 0
    %543 = vmatpush1.bf16.msra.mxu0 0
    %544 = vmatprep.subr.bf16.mxu0 0
    %545 = vmatpush1.bf16.msra.mxu0 0
    %546 = vmatprep.subr.bf16.mxu0 0
    %547 = vmatpush1.bf16.msra.mxu0 0
    %548 = vmatprep.subr.bf16.mxu0 0
    %549 = vmatpush1.bf16.msra.mxu0 0
    %550 = vmatprep.subr.bf16.mxu0 0
    %551 = vmatpush1.bf16.msra.mxu0 0
    %552 = vmatprep.subr.bf16.mxu0 0
    %553 = vmatpush1.bf16.msra.mxu0 %v65
    %554 = vmatprep.subr.bf16.mxu0 0
    %555 = vmatpush1.bf16.msra.mxu0 %v64
    %556 = vmatprep.subr.bf16.mxu0 0
    %557 = vmatpush2.bf16.msra.mxu0 0
    %558 = vmatprep.subr.bf16.mxu0 0
    %559 = vmatpush2.bf16.msra.mxu0 0
    %560 = vmatprep.subr.bf16.mxu0 0
    %561 = vmatpush2.bf16.msra.mxu0 0
    %562 = vmatprep.subr.bf16.mxu0 0
    %563 = vmatpush2.bf16.msra.mxu0 0
    %564 = vmatprep.subr.bf16.mxu0 0
    %565 = vmatpush2.bf16.msra.mxu0 0
    %566 = vmatprep.subr.bf16.mxu0 0
    %567 = vmatpush2.bf16.msra.mxu0 0
    %568 = vmatprep.subr.bf16.mxu0 0
    %569 = vmatpush2.bf16.msra.mxu0 0
    %570 = vmatprep.subr.bf16.mxu0 0
    %571 = vmatpush2.bf16.msra.mxu0 0
    %572 = vmatprep.mubr.bf16.mxu0 0
    %573 = vmatmul.mubr.bf16.gmra.mxu0 %v538
    %v574 = vpop.f32.mrf.mxu0
    %v575 = vadd.f32 %v172, %v574
    %v576 = vpop.f32.mrf.mxu0
    %v577 = vpop.f32.mrf.mxu0
    %v578 = vpop.f32.mrf.mxu0
    %579 = vdwg.mxu0
    %v580 = vxor.u32 %v575, 2147483648
    %v581 = vmul.f32 %v580, 1.442695
    %v582 = vpow.pop %v581
    %v583 = vadd.f32 %v582, 1.0
    %v584 = vrcp.pop %v583
    %v585 = vmul.f32 1.0, %v584
    %v586 = vtanh.pop %v575
    %v587 = vmul.f32 %v585, %v526
    %589 = vrot.lane.b32.xlu0 %v586, 64
    %v590 = vpop.permute.xlu0 %589
    %v592 = vmul.f32 %v585, %v590
    %594 = vrot.lane.b32.xlu0 %v592, 32
    %v595 = vpop.permute.xlu0 %594
    %v597 = vadd.f32 %v587, %v595
    %v598 = vtanh.pop %v597
    %600 = vrot.lane.b32.xlu0 %v598, 64
    %v601 = vpop.permute.xlu0 %600
    %v603 = vmul.f32 %v585, %v601
    %v604 = vpack.c.bf16 %v603, %v603
    %606 = vrot.lane.b32.xlu0 %v604, 32
    %v607 = vpop.permute.xlu0 %606
    %v609 = vsel %vm252, %v607, 0
    %611 = vmatprep.subr.bf16.mxu0 0
    %612 = vmatpush1.bf16.msra.mxu0 0
    %613 = vmatprep.subr.bf16.mxu0 0
    %614 = vmatpush1.bf16.msra.mxu0 0
    %615 = vmatprep.subr.bf16.mxu0 0
    %616 = vmatpush1.bf16.msra.mxu0 0
    %617 = vmatprep.subr.bf16.mxu0 0
    %618 = vmatpush1.bf16.msra.mxu0 0
    %619 = vmatprep.subr.bf16.mxu0 0
    %620 = vmatpush1.bf16.msra.mxu0 0
    %621 = vmatprep.subr.bf16.mxu0 0
    %622 = vmatpush1.bf16.msra.mxu0 0
    %623 = vmatprep.subr.bf16.mxu0 0
    %624 = vmatpush1.bf16.msra.mxu0 %v65
    %625 = vmatprep.subr.bf16.mxu0 0
    %626 = vmatpush1.bf16.msra.mxu0 %v64
    %627 = vmatprep.subr.bf16.mxu0 0
    %628 = vmatpush2.bf16.msra.mxu0 0
    %629 = vmatprep.subr.bf16.mxu0 0
    %630 = vmatpush2.bf16.msra.mxu0 0
    %631 = vmatprep.subr.bf16.mxu0 0
    %632 = vmatpush2.bf16.msra.mxu0 0
    %633 = vmatprep.subr.bf16.mxu0 0
    %634 = vmatpush2.bf16.msra.mxu0 0
    %635 = vmatprep.subr.bf16.mxu0 0
    %636 = vmatpush2.bf16.msra.mxu0 0
    %637 = vmatprep.subr.bf16.mxu0 0
    %638 = vmatpush2.bf16.msra.mxu0 0
    %639 = vmatprep.subr.bf16.mxu0 0
    %640 = vmatpush2.bf16.msra.mxu0 0
    %641 = vmatprep.subr.bf16.mxu0 0
    %642 = vmatpush2.bf16.msra.mxu0 0
    %643 = vmatprep.mubr.bf16.mxu0 0
    %644 = vmatmul.mubr.bf16.gmra.mxu0 %v609
    %v645 = vpop.f32.mrf.mxu0
    %v646 = vadd.f32 %v180, %v645
    %v647 = vpop.f32.mrf.mxu0
    %v648 = vpop.f32.mrf.mxu0
    %v649 = vpop.f32.mrf.mxu0
    %650 = vdwg.mxu0
    %v651 = vxor.u32 %v646, 2147483648
    %v652 = vmul.f32 %v651, 1.442695
    %v653 = vpow.pop %v652
    %v654 = vadd.f32 %v653, 1.0
    %v655 = vrcp.pop %v654
    %v656 = vmul.f32 1.0, %v655
    %v657 = vtanh.pop %v646
    %v658 = vmul.f32 %v656, %v597
    %660 = vrot.lane.b32.xlu0 %v657, 64
    %v661 = vpop.permute.xlu0 %660
    %v663 = vmul.f32 %v656, %v661
    %665 = vrot.lane.b32.xlu0 %v663, 32
    %v666 = vpop.permute.xlu0 %665
    %v668 = vadd.f32 %v658, %v666
    %v669 = vtanh.pop %v668
    %671 = vrot.lane.b32.xlu0 %v669, 64
    %v672 = vpop.permute.xlu0 %671
    %v674 = vmul.f32 %v656, %v672
    %v675 = vpack.c.bf16 %v674, %v674
    %677 = vrot.lane.b32.xlu0 %v675, 32
    %v678 = vpop.permute.xlu0 %677
    %v680 = vsel %vm252, %v678, 0
    %682 = vmatprep.subr.bf16.mxu0 0
    %683 = vmatpush1.bf16.msra.mxu0 0
    %684 = vmatprep.subr.bf16.mxu0 0
    %685 = vmatpush1.bf16.msra.mxu0 0
    %686 = vmatprep.subr.bf16.mxu0 0
    %687 = vmatpush1.bf16.msra.mxu0 0
    %688 = vmatprep.subr.bf16.mxu0 0
    %689 = vmatpush1.bf16.msra.mxu0 0
    %690 = vmatprep.subr.bf16.mxu0 0
    %691 = vmatpush1.bf16.msra.mxu0 0
    %692 = vmatprep.subr.bf16.mxu0 0
    %693 = vmatpush1.bf16.msra.mxu0 0
    %694 = vmatprep.subr.bf16.mxu0 0
    %695 = vmatpush1.bf16.msra.mxu0 %v65
    %696 = vmatprep.subr.bf16.mxu0 0
    %697 = vmatpush1.bf16.msra.mxu0 %v64
    %698 = vmatprep.subr.bf16.mxu0 0
    %699 = vmatpush2.bf16.msra.mxu0 0
    %700 = vmatprep.subr.bf16.mxu0 0
    %701 = vmatpush2.bf16.msra.mxu0 0
    %702 = vmatprep.subr.bf16.mxu0 0
    %703 = vmatpush2.bf16.msra.mxu0 0
    %704 = vmatprep.subr.bf16.mxu0 0
    %705 = vmatpush2.bf16.msra.mxu0 0
    %706 = vmatprep.subr.bf16.mxu0 0
    %707 = vmatpush2.bf16.msra.mxu0 0
    %708 = vmatprep.subr.bf16.mxu0 0
    %709 = vmatpush2.bf16.msra.mxu0 0
    %710 = vmatprep.subr.bf16.mxu0 0
    %711 = vmatpush2.bf16.msra.mxu0 0
    %712 = vmatprep.subr.bf16.mxu0 0
    %713 = vmatpush2.bf16.msra.mxu0 0
    %714 = vmatprep.mubr.bf16.mxu0 0
    %715 = vmatmul.mubr.bf16.gmra.mxu0 %v680
    %v716 = vpop.f32.mrf.mxu0
    %v717 = vadd.f32 %v179, %v716
    %v718 = vpop.f32.mrf.mxu0
    %v719 = vpop.f32.mrf.mxu0
    %v720 = vpop.f32.mrf.mxu0
    %721 = vdwg.mxu0
    %v722 = vxor.u32 %v717, 2147483648
    %v723 = vmul.f32 %v722, 1.442695
    %v724 = vpow.pop %v723
    %v725 = vadd.f32 %v724, 1.0
    %v726 = vrcp.pop %v725
    %v727 = vmul.f32 1.0, %v726
    %v728 = vtanh.pop %v717
    %v729 = vmul.f32 %v727, %v668
    %731 = vrot.lane.b32.xlu0 %v728, 64
    %v732 = vpop.permute.xlu0 %731
    %v734 = vmul.f32 %v727, %v732
    %736 = vrot.lane.b32.xlu0 %v734, 32
    %v737 = vpop.permute.xlu0 %736
    %v739 = vadd.f32 %v729, %v737
    %v740 = vtanh.pop %v739
    %742 = vrot.lane.b32.xlu0 %v740, 64
    %v743 = vpop.permute.xlu0 %742
    %v745 = vmul.f32 %v727, %v743
    %v746 = vpack.c.bf16 %v745, %v745
    %748 = vrot.lane.b32.xlu0 %v746, 32
    %v749 = vpop.permute.xlu0 %748
    %v751 = vsel %vm252, %v749, 0
    %753 = vmatprep.subr.bf16.mxu0 0
    %754 = vmatpush1.bf16.msra.mxu0 0
    %755 = vmatprep.subr.bf16.mxu0 0
    %756 = vmatpush1.bf16.msra.mxu0 0
    %757 = vmatprep.subr.bf16.mxu0 0
    %758 = vmatpush1.bf16.msra.mxu0 0
    %759 = vmatprep.subr.bf16.mxu0 0
    %760 = vmatpush1.bf16.msra.mxu0 0
    %761 = vmatprep.subr.bf16.mxu0 0
    %762 = vmatpush1.bf16.msra.mxu0 0
    %763 = vmatprep.subr.bf16.mxu0 0
    %764 = vmatpush1.bf16.msra.mxu0 0
    %765 = vmatprep.subr.bf16.mxu0 0
    %766 = vmatpush1.bf16.msra.mxu0 %v65
    %767 = vmatprep.subr.bf16.mxu0 0
    %768 = vmatpush1.bf16.msra.mxu0 %v64
    %769 = vmatprep.subr.bf16.mxu0 0
    %770 = vmatpush2.bf16.msra.mxu0 0
    %771 = vmatprep.subr.bf16.mxu0 0
    %772 = vmatpush2.bf16.msra.mxu0 0
    %773 = vmatprep.subr.bf16.mxu0 0
    %774 = vmatpush2.bf16.msra.mxu0 0
    %775 = vmatprep.subr.bf16.mxu0 0
    %776 = vmatpush2.bf16.msra.mxu0 0
    %777 = vmatprep.subr.bf16.mxu0 0
    %778 = vmatpush2.bf16.msra.mxu0 0
    %779 = vmatprep.subr.bf16.mxu0 0
    %780 = vmatpush2.bf16.msra.mxu0 0
    %781 = vmatprep.subr.bf16.mxu0 0
    %782 = vmatpush2.bf16.msra.mxu0 0
    %783 = vmatprep.subr.bf16.mxu0 0
    %784 = vmatpush2.bf16.msra.mxu0 0
    %785 = vmatprep.mubr.bf16.mxu0 0
    %786 = vmatmul.mubr.bf16.gmra.mxu0 %v751
    %v787 = vpop.f32.mrf.mxu0
    %v788 = vadd.f32 %v181, %v787
    %v789 = vpop.f32.mrf.mxu0
    %v790 = vpop.f32.mrf.mxu0
    %v791 = vpop.f32.mrf.mxu0
    %792 = vdwg.mxu0
    %v793 = vxor.u32 %v788, 2147483648
    %v794 = vmul.f32 %v793, 1.442695
    %v795 = vpow.pop %v794
    %v796 = vadd.f32 %v795, 1.0
    %v797 = vrcp.pop %v796
    %v798 = vmul.f32 1.0, %v797
    %v799 = vtanh.pop %v788
    %v800 = vmul.f32 %v798, %v739
    %802 = vrot.lane.b32.xlu0 %v799, 64
    %v803 = vpop.permute.xlu0 %802
    %v805 = vmul.f32 %v798, %v803
    %807 = vrot.lane.b32.xlu0 %v805, 32
    %v808 = vpop.permute.xlu0 %807
    %v810 = vadd.f32 %v800, %v808
    %v811 = vtanh.pop %v810
    %813 = vrot.lane.b32.xlu0 %v811, 64
    %v814 = vpop.permute.xlu0 %813
    %v816 = vmul.f32 %v798, %v814
    %v817 = vunpack.c.l.bf16 %v251
    %v818 = vlaneseq
    %v819 = vshrl.u32 %v818, 7
    %v820 = vsub.s32 0, %v819
    %v821 = vrot.slane %v817, %v820
    %v822 = vpack.c.bf16 %v816, %v816
    %824 = vrot.lane.b32.xlu0 %v822, 32
    %v825 = vpop.permute.xlu0 %824
    %v827 = vsel %vm252, %v825, 0
    %829 = vmatprep.subr.bf16.mxu0 0
    %830 = vmatpush1.bf16.msra.mxu0 0
    %831 = vmatprep.subr.bf16.mxu0 0
    %832 = vmatpush1.bf16.msra.mxu0 0
    %833 = vmatprep.subr.bf16.mxu0 0
    %834 = vmatpush1.bf16.msra.mxu0 0
    %835 = vmatprep.subr.bf16.mxu0 0
    %836 = vmatpush1.bf16.msra.mxu0 0
    %837 = vmatprep.subr.bf16.mxu0 0
    %838 = vmatpush1.bf16.msra.mxu0 0
    %839 = vmatprep.subr.bf16.mxu0 0
    %840 = vmatpush1.bf16.msra.mxu0 0
    %841 = vmatprep.subr.bf16.mxu0 %v77
    %842 = vmatpush1.bf16.msra.mxu0 %v76
    %843 = vmatprep.subr.bf16.mxu0 %v75
    %844 = vmatpush1.bf16.msra.mxu0 %v74
    %845 = vmatprep.subr.bf16.mxu0 0
    %846 = vmatpush2.bf16.msra.mxu0 0
    %847 = vmatprep.subr.bf16.mxu0 0
    %848 = vmatpush2.bf16.msra.mxu0 0
    %849 = vmatprep.subr.bf16.mxu0 0
    %850 = vmatpush2.bf16.msra.mxu0 0
    %851 = vmatprep.subr.bf16.mxu0 0
    %852 = vmatpush2.bf16.msra.mxu0 0
    %853 = vmatprep.subr.bf16.mxu0 0
    %854 = vmatpush2.bf16.msra.mxu0 0
    %855 = vmatprep.subr.bf16.mxu0 0
    %856 = vmatpush2.bf16.msra.mxu0 0
    %857 = vmatprep.subr.bf16.mxu0 0
    %858 = vmatpush2.bf16.msra.mxu0 0
    %859 = vmatprep.subr.bf16.mxu0 0
    %860 = vmatpush2.bf16.msra.mxu0 0
    %861 = vmatprep.mubr.bf16.mxu0 0
    %862 = vmatmul.mubr.bf16.gmra.mxu0 %v827
    %v863 = vpop.f32.mrf.mxu0
    %v864 = vadd.f32 0.0, %v863
    %v865 = vpop.f32.mrf.mxu0
    %v866 = vpop.f32.mrf.mxu0
    %v867 = vpop.f32.mrf.mxu0
    %868 = vdwg.mxu0
    %v869 = vadd.f32 %v864, %v821
    %v870 = vxor.u32 %v869, 2147483648
    %v871 = vmul.f32 %v870, 1.442695
    %v872 = vpow.pop %v871
    %v873 = vadd.f32 %v872, 1.0
    %v874 = vrcp.pop %v873
    %v875 = vmul.f32 1.0, %v874
    %v876 = vtanh.pop %v869
    %v877 = vmul.f32 %v875, %v810
    %879 = vrot.lane.b32.xlu0 %v876, 64
    %v880 = vpop.permute.xlu0 %879
    %v882 = vmul.f32 %v875, %v880
    %884 = vrot.lane.b32.xlu0 %v882, 32
    %v885 = vpop.permute.xlu0 %884
    %v887 = vadd.f32 %v877, %v885
    %v888 = vtanh.pop %v887
    %890 = vrot.lane.b32.xlu0 %v888, 64
    %v891 = vpop.permute.xlu0 %890
    %v893 = vmul.f32 %v875, %v891
    %v894 = vpack.c.bf16 %v893, %v893
    %896 = vrot.lane.b32.xlu0 %v894, 32
    %v897 = vpop.permute.xlu0 %896
    %v899 = vsel %vm252, %v897, 0
    %901 = vmatprep.subr.bf16.mxu0 0
    %902 = vmatpush1.bf16.msra.mxu0 0
    %903 = vmatprep.subr.bf16.mxu0 0
    %904 = vmatpush1.bf16.msra.mxu0 0
    %905 = vmatprep.subr.bf16.mxu0 0
    %906 = vmatpush1.bf16.msra.mxu0 0
    %907 = vmatprep.subr.bf16.mxu0 0
    %908 = vmatpush1.bf16.msra.mxu0 0
    %909 = vmatprep.subr.bf16.mxu0 0
    %910 = vmatpush1.bf16.msra.mxu0 0
    %911 = vmatprep.subr.bf16.mxu0 0
    %912 = vmatpush1.bf16.msra.mxu0 0
    %913 = vmatprep.subr.bf16.mxu0 %v77
    %914 = vmatpush1.bf16.msra.mxu0 %v76
    %915 = vmatprep.subr.bf16.mxu0 %v75
    %916 = vmatpush1.bf16.msra.mxu0 %v74
    %917 = vmatprep.subr.bf16.mxu0 0
    %918 = vmatpush2.bf16.msra.mxu0 0
    %919 = vmatprep.subr.bf16.mxu0 0
    %920 = vmatpush2.bf16.msra.mxu0 0
    %921 = vmatprep.subr.bf16.mxu0 0
    %922 = vmatpush2.bf16.msra.mxu0 0
    %923 = vmatprep.subr.bf16.mxu0 0
    %924 = vmatpush2.bf16.msra.mxu0 0
    %925 = vmatprep.subr.bf16.mxu0 0
    %926 = vmatpush2.bf16.msra.mxu0 0
    %927 = vmatprep.subr.bf16.mxu0 0
    %928 = vmatpush2.bf16.msra.mxu0 0
    %929 = vmatprep.subr.bf16.mxu0 0
    %930 = vmatpush2.bf16.msra.mxu0 0
    %931 = vmatprep.subr.bf16.mxu0 0
    %932 = vmatpush2.bf16.msra.mxu0 0
    %933 = vmatprep.mubr.bf16.mxu0 0
    %934 = vmatmul.mubr.bf16.gmra.mxu0 %v899
    %v935 = vpop.f32.mrf.mxu0
    %v936 = vadd.f32 0.0, %v935
    %v937 = vpop.f32.mrf.mxu0
    %v938 = vadd.f32 0.0, %v937
    %v939 = vpop.f32.mrf.mxu0
    %v940 = vpop.f32.mrf.mxu0
    %941 = vdwg.mxu0
    %v942 = vadd.f32 %v938, %v83
    %vm943 = vcmask 123904
    %944 = vst.msk [vmem:[#allocation7] sm:$0x3] %vm943, %v942
    %v945 = vlaneseq
    %v946 = vand.u32 %v945, 127
    %v947 = vsel %vm943, %v942, -inf
    %948 = vmax.xlane.f32.xlu0 %v947
    %v949 = vpop.xlane.xlu0 %948
    %vm950 = vcmp.ge.f32.partialorder %v942, %v949
    %v951 = vsel %vm950, %v946, 16
    %v952 = vsel %vm943, %v951, 2147483647
    %v953 = vand.u32 %v952, 65535
    %v954 = vshra.s32 %v952, 16
    %v955 = vcvt.s32.f32 %v953
    %v956 = vcvt.s32.f32 %v954
    %957 = vmin.xlane.f32.xlu0 %v956
    %v958 = vpop.xlane.xlu0 %957
    %vm959 = vcmp.eq.f32.partialorder %v956, %v958
    %v960 = vsel %vm959, %v955, inf
    %961 = vmin.xlane.f32.xlu0 %v960
    %v962 = vpop.xlane.xlu0 %961
    %v963 = vcvt.f32.s32 %v962
    %v964 = vcvt.f32.s32 %v958
    %v965 = vshll.u32 %v964, 16
    %v966 = vadd.s32 %v965, %v963
    %vm967 = vcmp.eq.s32.totalorder %v946, %v966
    %v968 = vsel %vm967, 1, 0
    %v969 = vcvt.s32.f32 %v968
    %v970 = vpack.c.bf16 %v969, %v969
    %vm971 = vcmask 130048
    %v973 = vsel %vm971, %v970, 0
    %975 = vmatprep.subr.bf16.mxu0 0
    %976 = vmatpush1.bf16.msra.mxu0 0
    %977 = vmatprep.subr.bf16.mxu0 0
    %978 = vmatpush1.bf16.msra.mxu0 0
    %979 = vmatprep.subr.bf16.mxu0 0
    %980 = vmatpush1.bf16.msra.mxu0 0
    %981 = vmatprep.subr.bf16.mxu0 0
    %982 = vmatpush1.bf16.msra.mxu0 0
    %983 = vmatprep.subr.bf16.mxu0 0
    %984 = vmatpush1.bf16.msra.mxu0 0
    %985 = vmatprep.subr.bf16.mxu0 0
    %986 = vmatpush1.bf16.msra.mxu0 0
    %987 = vmatprep.subr.bf16.mxu0 0
    %988 = vmatpush1.bf16.msra.mxu0 0
    %989 = vmatprep.subr.bf16.mxu0 0
    %990 = vmatpush1.bf16.msra.mxu0 %v251
    %991 = vmatprep.subr.bf16.mxu0 0
    %992 = vmatpush2.bf16.msra.mxu0 0
    %993 = vmatprep.subr.bf16.mxu0 0
    %994 = vmatpush2.bf16.msra.mxu0 0
    %995 = vmatprep.subr.bf16.mxu0 0
    %996 = vmatpush2.bf16.msra.mxu0 0
    %997 = vmatprep.subr.bf16.mxu0 0
    %998 = vmatpush2.bf16.msra.mxu0 0
    %999 = vmatprep.subr.bf16.mxu0 0
    %1000 = vmatpush2.bf16.msra.mxu0 0
    %1001 = vmatprep.subr.bf16.mxu0 0
    %1002 = vmatpush2.bf16.msra.mxu0 0
    %1003 = vmatprep.subr.bf16.mxu0 0
    %1004 = vmatpush2.bf16.msra.mxu0 0
    %1005 = vmatprep.subr.bf16.mxu0 0
    %1006 = vmatpush2.bf16.msra.mxu0 0
    %1007 = vmatprep.mubr.bf16.mxu0 0
    %1008 = vmatmul.mubr.bf16.gmra.mxu0 %v973
    %v1009 = vpop.f32.mrf.mxu0
    %v1010 = vadd.f32 0.0, %v1009
    %v1011 = vpop.f32.mrf.mxu0
    %v1012 = vpop.f32.mrf.mxu0
    %v1013 = vpop.f32.mrf.mxu0
    %1014 = vdwg.mxu0
    %v1015 = vadd.f32 %v936, %v1010
    %v1016 = vxor.u32 %v1015, 2147483648
    %v1017 = vmul.f32 %v1016, 1.442695
    %v1018 = vpow.pop %v1017
    %v1019 = vadd.f32 %v1018, 1.0
    %v1020 = vrcp.pop %v1019
    %v1021 = vmul.f32 1.0, %v1020
    %v1022 = vtanh.pop %v1015
    %v1023 = vmul.f32 %v1021, %v887
    %1025 = vrot.lane.b32.xlu0 %v1022, 64
    %v1026 = vpop.permute.xlu0 %1025
    %v1028 = vmul.f32 %v1021, %v1026
    %1030 = vrot.lane.b32.xlu0 %v1028, 32
    %v1031 = vpop.permute.xlu0 %1030
    %v1033 = vadd.f32 %v1023, %v1031
    %v1034 = vtanh.pop %v1033
    %1036 = vrot.lane.b32.xlu0 %v1034, 64
    %v1037 = vpop.permute.xlu0 %1036
    %v1039 = vmul.f32 %v1021, %v1037
    %v1040 = vpack.c.bf16 %v1039, %v1039
    %1042 = vrot.lane.b32.xlu0 %v1040, 32
    %v1043 = vpop.permute.xlu0 %1042
    %v1045 = vsel %vm252, %v1043, 0
    %1047 = vmatprep.subr.bf16.mxu0 0
    %1048 = vmatpush1.bf16.msra.mxu0 0
    %1049 = vmatprep.subr.bf16.mxu0 0
    %1050 = vmatpush1.bf16.msra.mxu0 0
    %1051 = vmatprep.subr.bf16.mxu0 0
    %1052 = vmatpush1.bf16.msra.mxu0 0
    %1053 = vmatprep.subr.bf16.mxu0 0
    %1054 = vmatpush1.bf16.msra.mxu0 0
    %1055 = vmatprep.subr.bf16.mxu0 0
    %1056 = vmatpush1.bf16.msra.mxu0 0
    %1057 = vmatprep.subr.bf16.mxu0 0
    %1058 = vmatpush1.bf16.msra.mxu0 0
    %1059 = vmatprep.subr.bf16.mxu0 %v77
    %1060 = vmatpush1.bf16.msra.mxu0 %v76
    %1061 = vmatprep.subr.bf16.mxu0 %v75
    %1062 = vmatpush1.bf16.msra.mxu0 %v74
    %1063 = vmatprep.subr.bf16.mxu0 0
    %1064 = vmatpush2.bf16.msra.mxu0 0
    %1065 = vmatprep.subr.bf16.mxu0 0
    %1066 = vmatpush2.bf16.msra.mxu0 0
    %1067 = vmatprep.subr.bf16.mxu0 0
    %1068 = vmatpush2.bf16.msra.mxu0 0
    %1069 = vmatprep.subr.bf16.mxu0 0
    %1070 = vmatpush2.bf16.msra.mxu0 0
    %1071 = vmatprep.subr.bf16.mxu0 0
    %1072 = vmatpush2.bf16.msra.mxu0 0
    %1073 = vmatprep.subr.bf16.mxu0 0
    %1074 = vmatpush2.bf16.msra.mxu0 0
    %1075 = vmatprep.subr.bf16.mxu0 0
    %1076 = vmatpush2.bf16.msra.mxu0 0
    %1077 = vmatprep.subr.bf16.mxu0 0
    %1078 = vmatpush2.bf16.msra.mxu0 0
    %1079 = vmatprep.mubr.bf16.mxu0 0
    %1080 = vmatmul.mubr.bf16.gmra.mxu0 %v1045
    %v1081 = vpop.f32.mrf.mxu0
    %v1082 = vadd.f32 0.0, %v1081
    %v1083 = vpop.f32.mrf.mxu0
    %v1084 = vadd.f32 0.0, %v1083
    %v1085 = vpop.f32.mrf.mxu0
    %v1086 = vpop.f32.mrf.mxu0
    %1087 = vdwg.mxu0
    %v1088 = vadd.f32 %v1084, %v83
    %s1089 = scalar_lea.vmem [#allocation7], 2
    %1090 = vst.msk [vmem:[%s1089] sm:$0x3] %vm943, %v1088
    %v1091 = vsel %vm943, %v1088, -inf
    %1092 = vmax.xlane.f32.xlu0 %v1091
    %v1093 = vpop.xlane.xlu0 %1092
    %vm1094 = vcmp.ge.f32.partialorder %v1088, %v1093
    %v1095 = vsel %vm1094, %v946, 16
    %v1096 = vsel %vm943, %v1095, 2147483647
    %v1097 = vand.u32 %v1096, 65535
    %v1098 = vshra.s32 %v1096, 16
    %v1099 = vcvt.s32.f32 %v1097
    %v1100 = vcvt.s32.f32 %v1098
    %1101 = vmin.xlane.f32.xlu0 %v1100
    %v1102 = vpop.xlane.xlu0 %1101
    %vm1103 = vcmp.eq.f32.partialorder %v1100, %v1102
    %v1104 = vsel %vm1103, %v1099, inf
    %1105 = vmin.xlane.f32.xlu0 %v1104
    %v1106 = vpop.xlane.xlu0 %1105
    %v1107 = vcvt.f32.s32 %v1106
    %v1108 = vcvt.f32.s32 %v1102
    %v1109 = vshll.u32 %v1108, 16
    %v1110 = vadd.s32 %v1109, %v1107
    %vm1111 = vcmp.eq.s32.totalorder %v946, %v1110
    %v1112 = vsel %vm1111, 1, 0
    %v1113 = vcvt.s32.f32 %v1112
    %v1114 = vpack.c.bf16 %v1113, %v1113
    %v1116 = vsel %vm971, %v1114, 0
    %1118 = vmatprep.subr.bf16.mxu0 0
    %1119 = vmatpush1.bf16.msra.mxu0 0
    %1120 = vmatprep.subr.bf16.mxu0 0
    %1121 = vmatpush1.bf16.msra.mxu0 0
    %1122 = vmatprep.subr.bf16.mxu0 0
    %1123 = vmatpush1.bf16.msra.mxu0 0
    %1124 = vmatprep.subr.bf16.mxu0 0
    %1125 = vmatpush1.bf16.msra.mxu0 0
    %1126 = vmatprep.subr.bf16.mxu0 0
    %1127 = vmatpush1.bf16.msra.mxu0 0
    %1128 = vmatprep.subr.bf16.mxu0 0
    %1129 = vmatpush1.bf16.msra.mxu0 0
    %1130 = vmatprep.subr.bf16.mxu0 0
    %1131 = vmatpush1.bf16.msra.mxu0 0
    %1132 = vmatprep.subr.bf16.mxu0 0
    %1133 = vmatpush1.bf16.msra.mxu0 %v251
    %1134 = vmatprep.subr.bf16.mxu0 0
    %1135 = vmatpush2.bf16.msra.mxu0 0
    %1136 = vmatprep.subr.bf16.mxu0 0
    %1137 = vmatpush2.bf16.msra.mxu0 0
    %1138 = vmatprep.subr.bf16.mxu0 0
    %1139 = vmatpush2.bf16.msra.mxu0 0
    %1140 = vmatprep.subr.bf16.mxu0 0
    %1141 = vmatpush2.bf16.msra.mxu0 0
    %1142 = vmatprep.subr.bf16.mxu0 0
    %1143 = vmatpush2.bf16.msra.mxu0 0
    %1144 = vmatprep.subr.bf16.mxu0 0
    %1145 = vmatpush2.bf16.msra.mxu0 0
    %1146 = vmatprep.subr.bf16.mxu0 0
    %1147 = vmatpush2.bf16.msra.mxu0 0
    %1148 = vmatprep.subr.bf16.mxu0 0
    %1149 = vmatpush2.bf16.msra.mxu0 0
    %1150 = vmatprep.mubr.bf16.mxu0 0
    %1151 = vmatmul.mubr.bf16.gmra.mxu0 %v1116
    %v1152 = vpop.f32.mrf.mxu0
    %v1153 = vadd.f32 0.0, %v1152
    %v1154 = vpop.f32.mrf.mxu0
    %v1155 = vpop.f32.mrf.mxu0
    %v1156 = vpop.f32.mrf.mxu0
    %1157 = vdwg.mxu0
    %v1158 = vadd.f32 %v1082, %v1153
    %v1159 = vxor.u32 %v1158, 2147483648
    %v1160 = vmul.f32 %v1159, 1.442695
    %v1161 = vpow.pop %v1160
    %v1162 = vadd.f32 %v1161, 1.0
    %v1163 = vrcp.pop %v1162
    %v1164 = vmul.f32 1.0, %v1163
    %v1165 = vtanh.pop %v1158
    %v1166 = vmul.f32 %v1164, %v1033
    %1168 = vrot.lane.b32.xlu0 %v1165, 64
    %v1169 = vpop.permute.xlu0 %1168
    %v1171 = vmul.f32 %v1164, %v1169
    %1173 = vrot.lane.b32.xlu0 %v1171, 32
    %v1174 = vpop.permute.xlu0 %1173
    %v1176 = vadd.f32 %v1166, %v1174
    %v1177 = vtanh.pop %v1176
    %1179 = vrot.lane.b32.xlu0 %v1177, 64
    %v1180 = vpop.permute.xlu0 %1179
    %v1182 = vmul.f32 %v1164, %v1180
    %v1183 = vpack.c.bf16 %v1182, %v1182
    %1185 = vrot.lane.b32.xlu0 %v1183, 32
    %v1186 = vpop.permute.xlu0 %1185
    %v1188 = vsel %vm252, %v1186, 0
    %1190 = vmatprep.subr.bf16.mxu0 0
    %1191 = vmatpush1.bf16.msra.mxu0 0
    %1192 = vmatprep.subr.bf16.mxu0 0
    %1193 = vmatpush1.bf16.msra.mxu0 0
    %1194 = vmatprep.subr.bf16.mxu0 0
    %1195 = vmatpush1.bf16.msra.mxu0 0
    %1196 = vmatprep.subr.bf16.mxu0 0
    %1197 = vmatpush1.bf16.msra.mxu0 0
    %1198 = vmatprep.subr.bf16.mxu0 0
    %1199 = vmatpush1.bf16.msra.mxu0 0
    %1200 = vmatprep.subr.bf16.mxu0 0
    %1201 = vmatpush1.bf16.msra.mxu0 0
    %1202 = vmatprep.subr.bf16.mxu0 %v77
    %1203 = vmatpush1.bf16.msra.mxu0 %v76
    %1204 = vmatprep.subr.bf16.mxu0 %v75
    %1205 = vmatpush1.bf16.msra.mxu0 %v74
    %1206 = vmatprep.subr.bf16.mxu0 0
    %1207 = vmatpush2.bf16.msra.mxu0 0
    %1208 = vmatprep.subr.bf16.mxu0 0
    %1209 = vmatpush2.bf16.msra.mxu0 0
    %1210 = vmatprep.subr.bf16.mxu0 0
    %1211 = vmatpush2.bf16.msra.mxu0 0
    %1212 = vmatprep.subr.bf16.mxu0 0
    %1213 = vmatpush2.bf16.msra.mxu0 0
    %1214 = vmatprep.subr.bf16.mxu0 0
    %1215 = vmatpush2.bf16.msra.mxu0 0
    %1216 = vmatprep.subr.bf16.mxu0 0
    %1217 = vmatpush2.bf16.msra.mxu0 0
    %1218 = vmatprep.subr.bf16.mxu0 0
    %1219 = vmatpush2.bf16.msra.mxu0 0
    %1220 = vmatprep.subr.bf16.mxu0 0
    %1221 = vmatpush2.bf16.msra.mxu0 0
    %1222 = vmatprep.mubr.bf16.mxu0 0
    %1223 = vmatmul.mubr.bf16.gmra.mxu0 %v1188
    %v1224 = vpop.f32.mrf.mxu0
    %v1225 = vadd.f32 0.0, %v1224
    %v1226 = vpop.f32.mrf.mxu0
    %v1227 = vadd.f32 0.0, %v1226
    %v1228 = vpop.f32.mrf.mxu0
    %v1229 = vpop.f32.mrf.mxu0
    %1230 = vdwg.mxu0
    %v1231 = vadd.f32 %v1227, %v83
    %s1232 = scalar_lea.vmem [#allocation7], 4
    %1233 = vst.msk [vmem:[%s1232] sm:$0x3] %vm943, %v1231
    %v1234 = vsel %vm943, %v1231, -inf
    %1235 = vmax.xlane.f32.xlu0 %v1234
    %v1236 = vpop.xlane.xlu0 %1235
    %vm1237 = vcmp.ge.f32.partialorder %v1231, %v1236
    %v1238 = vsel %vm1237, %v946, 16
    %v1239 = vsel %vm943, %v1238, 2147483647
    %v1240 = vand.u32 %v1239, 65535
    %v1241 = vshra.s32 %v1239, 16
    %v1242 = vcvt.s32.f32 %v1240
    %v1243 = vcvt.s32.f32 %v1241
    %1244 = vmin.xlane.f32.xlu0 %v1243
    %v1245 = vpop.xlane.xlu0 %1244
    %vm1246 = vcmp.eq.f32.partialorder %v1243, %v1245
    %v1247 = vsel %vm1246, %v1242, inf
    %1248 = vmin.xlane.f32.xlu0 %v1247
    %v1249 = vpop.xlane.xlu0 %1248
    %v1250 = vcvt.f32.s32 %v1249
    %v1251 = vcvt.f32.s32 %v1245
    %v1252 = vshll.u32 %v1251, 16
    %v1253 = vadd.s32 %v1252, %v1250
    %vm1254 = vcmp.eq.s32.totalorder %v946, %v1253
    %v1255 = vsel %vm1254, 1, 0
    %v1256 = vcvt.s32.f32 %v1255
    %v1257 = vpack.c.bf16 %v1256, %v1256
    %v1259 = vsel %vm971, %v1257, 0
    %1261 = vmatprep.subr.bf16.mxu0 0
    %1262 = vmatpush1.bf16.msra.mxu0 0
    %1263 = vmatprep.subr.bf16.mxu0 0
    %1264 = vmatpush1.bf16.msra.mxu0 0
    %1265 = vmatprep.subr.bf16.mxu0 0
    %1266 = vmatpush1.bf16.msra.mxu0 0
    %1267 = vmatprep.subr.bf16.mxu0 0
    %1268 = vmatpush1.bf16.msra.mxu0 0
    %1269 = vmatprep.subr.bf16.mxu0 0
    %1270 = vmatpush1.bf16.msra.mxu0 0
    %1271 = vmatprep.subr.bf16.mxu0 0
    %1272 = vmatpush1.bf16.msra.mxu0 0
    %1273 = vmatprep.subr.bf16.mxu0 0
    %1274 = vmatpush1.bf16.msra.mxu0 0
    %1275 = vmatprep.subr.bf16.mxu0 0
    %1276 = vmatpush1.bf16.msra.mxu0 %v251
    %1277 = vmatprep.subr.bf16.mxu0 0
    %1278 = vmatpush2.bf16.msra.mxu0 0
    %1279 = vmatprep.subr.bf16.mxu0 0
    %1280 = vmatpush2.bf16.msra.mxu0 0
    %1281 = vmatprep.subr.bf16.mxu0 0
    %1282 = vmatpush2.bf16.msra.mxu0 0
    %1283 = vmatprep.subr.bf16.mxu0 0
    %1284 = vmatpush2.bf16.msra.mxu0 0
    %1285 = vmatprep.subr.bf16.mxu0 0
    %1286 = vmatpush2.bf16.msra.mxu0 0
    %1287 = vmatprep.subr.bf16.mxu0 0
    %1288 = vmatpush2.bf16.msra.mxu0 0
    %1289 = vmatprep.subr.bf16.mxu0 0
    %1290 = vmatpush2.bf16.msra.mxu0 0
    %1291 = vmatprep.subr.bf16.mxu0 0
    %1292 = vmatpush2.bf16.msra.mxu0 0
    %1293 = vmatprep.mubr.bf16.mxu0 0
    %1294 = vmatmul.mubr.bf16.gmra.mxu0 %v1259
    %v1295 = vpop.f32.mrf.mxu0
    %v1296 = vadd.f32 0.0, %v1295
    %v1297 = vpop.f32.mrf.mxu0
    %v1298 = vpop.f32.mrf.mxu0
    %v1299 = vpop.f32.mrf.mxu0
    %1300 = vdwg.mxu0
    %v1301 = vadd.f32 %v1225, %v1296
    %v1302 = vxor.u32 %v1301, 2147483648
    %v1303 = vmul.f32 %v1302, 1.442695
    %v1304 = vpow.pop %v1303
    %v1305 = vadd.f32 %v1304, 1.0
    %v1306 = vrcp.pop %v1305
    %v1307 = vmul.f32 1.0, %v1306
    %v1308 = vtanh.pop %v1301
    %v1309 = vmul.f32 %v1307, %v1176
    %1311 = vrot.lane.b32.xlu0 %v1308, 64
    %v1312 = vpop.permute.xlu0 %1311
    %v1314 = vmul.f32 %v1307, %v1312
    %1316 = vrot.lane.b32.xlu0 %v1314, 32
    %v1317 = vpop.permute.xlu0 %1316
    %v1319 = vadd.f32 %v1309, %v1317
    %v1320 = vtanh.pop %v1319
    %1322 = vrot.lane.b32.xlu0 %v1320, 64
    %v1323 = vpop.permute.xlu0 %1322
    %v1325 = vmul.f32 %v1307, %v1323
    %v1326 = vpack.c.bf16 %v1325, %v1325
    %1328 = vrot.lane.b32.xlu0 %v1326, 32
    %v1329 = vpop.permute.xlu0 %1328
    %v1331 = vsel %vm252, %v1329, 0
    %1333 = vmatprep.subr.bf16.mxu0 0
    %1334 = vmatpush1.bf16.msra.mxu0 0
    %1335 = vmatprep.subr.bf16.mxu0 0
    %1336 = vmatpush1.bf16.msra.mxu0 0
    %1337 = vmatprep.subr.bf16.mxu0 0
    %1338 = vmatpush1.bf16.msra.mxu0 0
    %1339 = vmatprep.subr.bf16.mxu0 0
    %1340 = vmatpush1.bf16.msra.mxu0 0
    %1341 = vmatprep.subr.bf16.mxu0 0
    %1342 = vmatpush1.bf16.msra.mxu0 0
    %1343 = vmatprep.subr.bf16.mxu0 0
    %1344 = vmatpush1.bf16.msra.mxu0 0
    %1345 = vmatprep.subr.bf16.mxu0 %v77
    %1346 = vmatpush1.bf16.msra.mxu0 %v76
    %1347 = vmatprep.subr.bf16.mxu0 %v75
    %1348 = vmatpush1.bf16.msra.mxu0 %v74
    %1349 = vmatprep.subr.bf16.mxu0 0
    %1350 = vmatpush2.bf16.msra.mxu0 0
    %1351 = vmatprep.subr.bf16.mxu0 0
    %1352 = vmatpush2.bf16.msra.mxu0 0
    %1353 = vmatprep.subr.bf16.mxu0 0
    %1354 = vmatpush2.bf16.msra.mxu0 0
    %1355 = vmatprep.subr.bf16.mxu0 0
    %1356 = vmatpush2.bf16.msra.mxu0 0
    %1357 = vmatprep.subr.bf16.mxu0 0
    %1358 = vmatpush2.bf16.msra.mxu0 0
    %1359 = vmatprep.subr.bf16.mxu0 0
    %1360 = vmatpush2.bf16.msra.mxu0 0
    %1361 = vmatprep.subr.bf16.mxu0 0
    %1362 = vmatpush2.bf16.msra.mxu0 0
    %1363 = vmatprep.subr.bf16.mxu0 0
    %1364 = vmatpush2.bf16.msra.mxu0 0
    %1365 = vmatprep.mubr.bf16.mxu0 0
    %1366 = vmatmul.mubr.bf16.gmra.mxu0 %v1331
    %v1367 = vpop.f32.mrf.mxu0
    %v1368 = vadd.f32 0.0, %v1367
    %v1369 = vpop.f32.mrf.mxu0
    %v1370 = vadd.f32 0.0, %v1369
    %v1371 = vpop.f32.mrf.mxu0
    %v1372 = vpop.f32.mrf.mxu0
    %1373 = vdwg.mxu0
    %v1374 = vadd.f32 %v1370, %v83
    %s1375 = scalar_lea.vmem [#allocation7], 6
    %1376 = vst.msk [vmem:[%s1375] sm:$0x3] %vm943, %v1374
    %v1377 = vsel %vm943, %v1374, -inf
    %1378 = vmax.xlane.f32.xlu0 %v1377
    %v1379 = vpop.xlane.xlu0 %1378
    %vm1380 = vcmp.ge.f32.partialorder %v1374, %v1379
    %v1381 = vsel %vm1380, %v946, 16
    %v1382 = vsel %vm943, %v1381, 2147483647
    %v1383 = vand.u32 %v1382, 65535
    %v1384 = vshra.s32 %v1382, 16
    %v1385 = vcvt.s32.f32 %v1383
    %v1386 = vcvt.s32.f32 %v1384
    %1387 = vmin.xlane.f32.xlu0 %v1386
    %v1388 = vpop.xlane.xlu0 %1387
    %vm1389 = vcmp.eq.f32.partialorder %v1386, %v1388
    %v1390 = vsel %vm1389, %v1385, inf
    %1391 = vmin.xlane.f32.xlu0 %v1390
    %v1392 = vpop.xlane.xlu0 %1391
    %v1393 = vcvt.f32.s32 %v1392
    %v1394 = vcvt.f32.s32 %v1388
    %v1395 = vshll.u32 %v1394, 16
    %v1396 = vadd.s32 %v1395, %v1393
    %vm1397 = vcmp.eq.s32.totalorder %v946, %v1396
    %v1398 = vsel %vm1397, 1, 0
    %v1399 = vcvt.s32.f32 %v1398
    %v1400 = vpack.c.bf16 %v1399, %v1399
    %v1402 = vsel %vm971, %v1400, 0
    %1404 = vmatprep.subr.bf16.mxu0 0
    %1405 = vmatpush1.bf16.msra.mxu0 0
    %1406 = vmatprep.subr.bf16.mxu0 0
    %1407 = vmatpush1.bf16.msra.mxu0 0
    %1408 = vmatprep.subr.bf16.mxu0 0
    %1409 = vmatpush1.bf16.msra.mxu0 0
    %1410 = vmatprep.subr.bf16.mxu0 0
    %1411 = vmatpush1.bf16.msra.mxu0 0
    %1412 = vmatprep.subr.bf16.mxu0 0
    %1413 = vmatpush1.bf16.msra.mxu0 0
    %1414 = vmatprep.subr.bf16.mxu0 0
    %1415 = vmatpush1.bf16.msra.mxu0 0
    %1416 = vmatprep.subr.bf16.mxu0 0
    %1417 = vmatpush1.bf16.msra.mxu0 0
    %1418 = vmatprep.subr.bf16.mxu0 0
    %1419 = vmatpush1.bf16.msra.mxu0 %v251
    %1420 = vmatprep.subr.bf16.mxu0 0
    %1421 = vmatpush2.bf16.msra.mxu0 0
    %1422 = vmatprep.subr.bf16.mxu0 0
    %1423 = vmatpush2.bf16.msra.mxu0 0
    %1424 = vmatprep.subr.bf16.mxu0 0
    %1425 = vmatpush2.bf16.msra.mxu0 0
    %1426 = vmatprep.subr.bf16.mxu0 0
    %1427 = vmatpush2.bf16.msra.mxu0 0
    %1428 = vmatprep.subr.bf16.mxu0 0
    %1429 = vmatpush2.bf16.msra.mxu0 0
    %1430 = vmatprep.subr.bf16.mxu0 0
    %1431 = vmatpush2.bf16.msra.mxu0 0
    %1432 = vmatprep.subr.bf16.mxu0 0
    %1433 = vmatpush2.bf16.msra.mxu0 0
    %1434 = vmatprep.subr.bf16.mxu0 0
    %1435 = vmatpush2.bf16.msra.mxu0 0
    %1436 = vmatprep.mubr.bf16.mxu0 0
    %1437 = vmatmul.mubr.bf16.gmra.mxu0 %v1402
    %v1438 = vpop.f32.mrf.mxu0
    %v1439 = vadd.f32 0.0, %v1438
    %v1440 = vpop.f32.mrf.mxu0
    %v1441 = vpop.f32.mrf.mxu0
    %v1442 = vpop.f32.mrf.mxu0
    %1443 = vdwg.mxu0
    %v1444 = vadd.f32 %v1368, %v1439
    %v1445 = vxor.u32 %v1444, 2147483648
    %v1446 = vmul.f32 %v1445, 1.442695
    %v1447 = vpow.pop %v1446
    %v1448 = vadd.f32 %v1447, 1.0
    %v1449 = vrcp.pop %v1448
    %v1450 = vmul.f32 1.0, %v1449
    %v1451 = vtanh.pop %v1444
    %v1452 = vmul.f32 %v1450, %v1319
    %1454 = vrot.lane.b32.xlu0 %v1451, 64
    %v1455 = vpop.permute.xlu0 %1454
    %v1457 = vmul.f32 %v1450, %v1455
    %1459 = vrot.lane.b32.xlu0 %v1457, 32
    %v1460 = vpop.permute.xlu0 %1459
    %v1462 = vadd.f32 %v1452, %v1460
    %v1463 = vtanh.pop %v1462
    %1465 = vrot.lane.b32.xlu0 %v1463, 64
    %v1466 = vpop.permute.xlu0 %1465
    %v1468 = vmul.f32 %v1450, %v1466
    %v1469 = vpack.c.bf16 %v1468, %v1468
    %1471 = vrot.lane.b32.xlu0 %v1469, 32
    %v1472 = vpop.permute.xlu0 %1471
    %v1474 = vsel %vm252, %v1472, 0
    %1476 = vmatprep.subr.bf16.mxu0 0
    %1477 = vmatpush1.bf16.msra.mxu0 0
    %1478 = vmatprep.subr.bf16.mxu0 0
    %1479 = vmatpush1.bf16.msra.mxu0 0
    %1480 = vmatprep.subr.bf16.mxu0 0
    %1481 = vmatpush1.bf16.msra.mxu0 0
    %1482 = vmatprep.subr.bf16.mxu0 0
    %1483 = vmatpush1.bf16.msra.mxu0 0
    %1484 = vmatprep.subr.bf16.mxu0 0
    %1485 = vmatpush1.bf16.msra.mxu0 0
    %1486 = vmatprep.subr.bf16.mxu0 0
    %1487 = vmatpush1.bf16.msra.mxu0 0
    %1488 = vmatprep.subr.bf16.mxu0 %v77
    %1489 = vmatpush1.bf16.msra.mxu0 %v76
    %1490 = vmatprep.subr.bf16.mxu0 %v75
    %1491 = vmatpush1.bf16.msra.mxu0 %v74
    %1492 = vmatprep.subr.bf16.mxu0 0
    %1493 = vmatpush2.bf16.msra.mxu0 0
    %1494 = vmatprep.subr.bf16.mxu0 0
    %1495 = vmatpush2.bf16.msra.mxu0 0
    %1496 = vmatprep.subr.bf16.mxu0 0
    %1497 = vmatpush2.bf16.msra.mxu0 0
    %1498 = vmatprep.subr.bf16.mxu0 0
    %1499 = vmatpush2.bf16.msra.mxu0 0
    %1500 = vmatprep.subr.bf16.mxu0 0
    %1501 = vmatpush2.bf16.msra.mxu0 0
    %1502 = vmatprep.subr.bf16.mxu0 0
    %1503 = vmatpush2.bf16.msra.mxu0 0
    %1504 = vmatprep.subr.bf16.mxu0 0
    %1505 = vmatpush2.bf16.msra.mxu0 0
    %1506 = vmatprep.subr.bf16.mxu0 0
    %1507 = vmatpush2.bf16.msra.mxu0 0
    %1508 = vmatprep.mubr.bf16.mxu0 0
    %1509 = vmatmul.mubr.bf16.gmra.mxu0 %v1474
    %v1510 = vpop.f32.mrf.mxu0
    %v1511 = vpop.f32.mrf.mxu0
    %v1512 = vadd.f32 0.0, %v1511
    %v1513 = vpop.f32.mrf.mxu0
    %v1514 = vpop.f32.mrf.mxu0
    %1515 = vdwg.mxu0
    %v1516 = vadd.f32 %v1512, %v83
    %s1517 = scalar_lea.vmem [#allocation7], 8
    %1518 = vst.msk [vmem:[%s1517] sm:$0x3] %vm943, %v1516
    // Predicated region
    $region46: #{tpu_custom_call.1} parent=1 // pred_check
      _
    $region47: #{tpu_custom_call.1} parent=1 // pred_check_branch
      %1520 = sbr.rel (0) target = $region49
    $region48: #{tpu_custom_call.1} parent=1 // pred_region
      %s1522 = ssub.s32 160, 160
      %1523 = vsyncadd [#allocation4], %s1522
      %s1524 = sshll.u32 [#allocation7], 4
      %s1525 = int_to_ptr.vmem [resolvable:$true] %s1524
      %1530 = dma.vmem_to_hbm [thread:$0]  %s1525, 160, %s9, [#allocation4], 32, 32, 2
    $region49: #{tpu_custom_call.1} parent=1 // pred_fallthru
      _
    // Predicated region
    $region50: #{tpu_custom_call.1} parent=1 // pred_check
      _
    $region51: #{tpu_custom_call.1} parent=1 // pred_check_branch
      %1532 = sbr.rel (0) target = $region53
    $region52: #{tpu_custom_call.1} parent=1 // pred_region
      %1533 = dma.done [#allocation4], 160
    $region53: #{tpu_custom_call.1} parent=1 // pred_fallthru
      _
    %1534 = vsyncpa [#allocation3], 1
    %1535 = vsyncpa [#allocation6], 1
    %1536 = vsyncpa [#allocation4], 1

</llo_original>
